<compile_context>
chip_gen: v5e
topology: v5e:2x2
jax: 0.10.0
libtpu: 0.0.40
codegen_flags: <defaults>
</compile_context>

<pallas_src>
import jax
import jax.numpy as jnp
from jax.experimental import pallas as pl
from jax.experimental.pallas import tpu as pltpu

VIEW_PE = 6
IN_CHANNEL = 16 * 3                       # TensorBase.app_dim = 16*3 = 48
FEATURE_C = 128
IDE_DIM = 2 * VIEW_PE * 3 + 14            # 50  (matches in_mlpC bookkeeping)
IN_MLPC = IN_CHANNEL * 2 + 3 + IDE_DIM    # 149
IN_PAD = 256                              # concat dim zero-padded to lane multiple
OUT_PAD = FEATURE_C                       # lane-dense output slab (128), slice [:3]


def _shader_kernel(x_ref, w1_ref, b1_ref, w2_ref, b2_ref, w3_ref, out_ref):
    # x_ref: (tn, 256) bf16, already tanh'd/concatenated/zero-padded in wrapper.
    x = x_ref[...]
    h1 = jnp.dot(x, w1_ref[...], preferred_element_type=jnp.float32) + b1_ref[...]
    h1 = jnp.maximum(h1, 0.0).astype(jnp.bfloat16)                       # ReLU
    h2 = jnp.dot(h1, w2_ref[...], preferred_element_type=jnp.float32) + b2_ref[...]
    h2 = jnp.maximum(h2, 0.0).astype(jnp.bfloat16)                       # ReLU
    spec = jnp.dot(h2, w3_ref[...], preferred_element_type=jnp.float32)  # layer3, no bias
    out_ref[...] = jnp.tanh(spec)        # tanh(0)=0 on the padded lanes; sliced in wrapper


def integrated_dir_enc(viewdirs, roughness, viewpe):
    # TODO(synk): generate_ide_fn is not defined in the provided source; this is a
    # deterministic Ref-NeRF-style surrogate with the exact expected width
    # (2*viewpe*3 + 14 = 50): roughness-attenuated sin/cos frequency features
    # plus 14 low-order polynomial features of the view direction.
    n = viewdirs.shape[0]
    freqs = 2.0 ** jnp.arange(viewpe, dtype=jnp.float32)                 # (P,)
    ang = viewdirs[:, None, :] * freqs[None, :, None]                    # (N, P, 3)
    atten = jnp.exp(-0.5 * roughness[:, :, None] * freqs[None, :, None] ** 2)  # (N, P, 1)
    sincos = jnp.concatenate([jnp.sin(ang) * atten, jnp.cos(ang) * atten], axis=-1)
    sincos = sincos.reshape(n, 2 * viewpe * 3)                           # (N, 36)
    x, y, z = viewdirs[:, 0:1], viewdirs[:, 1:2], viewdirs[:, 2:3]
    poly = jnp.concatenate(
        [x, y, z, x * x, y * y, z * z, x * y, x * z, y * z,
         x * x * y, y * y * z, z * z * x, x * y * z, jnp.exp(-roughness)],
        axis=-1)                                                         # (N, 14)
    return jnp.concatenate([sincos, poly], axis=-1)                      # (N, 50)


def init_params(key):
    ks = jax.random.split(key, 5)

    def unif(k, shape, fan_in):
        bound = 1.0 / jnp.sqrt(jnp.float32(fan_in))
        return jax.random.uniform(k, shape, jnp.float32, -bound, bound)

    # Weights stored (in_features, out_features), zero-padded, cast to bf16.
    w1 = unif(ks[0], (IN_MLPC, FEATURE_C), IN_MLPC)
    w1 = jnp.zeros((IN_PAD, FEATURE_C), jnp.float32).at[:IN_MLPC].set(w1)
    b1 = unif(ks[1], (1, FEATURE_C), IN_MLPC)            # bias bound = 1/sqrt(fan_in)
    w2 = unif(ks[2], (FEATURE_C, FEATURE_C), FEATURE_C)
    b2 = unif(ks[3], (1, FEATURE_C), FEATURE_C)
    w3 = unif(ks[4], (FEATURE_C, 3), FEATURE_C)          # layer3: Linear(featureC, 3, no bias)
    w3 = jnp.zeros((FEATURE_C, OUT_PAD), jnp.float32).at[:, :3].set(w3)
    return dict(
        w1=w1.astype(jnp.bfloat16), b1=b1,
        w2=w2.astype(jnp.bfloat16), b2=b2,
        w3=w3.astype(jnp.bfloat16),
    )


def tensorbase_forward(xyz):
    # TensorBase.forward -> compute_appfeature is an empty stub in the base class.
    return None


def forward_shader(params, pts, roughness, viewdirs, brdf, local_light, *, tn=512):
    del pts  # pts is accepted but unused by MLPRender_Fea.forward
    n = brdf.shape[0]

    # Elementwise prep + concat done once in the wrapper (lane-dense input slab).
    rough_act = jax.nn.softplus(roughness - 1.0)            # Softplus()(roughness - 1.0)
    ide = integrated_dir_enc(viewdirs, rough_act, VIEW_PE)  # (N, 50)
    mlp_in = jnp.concatenate(
        [jnp.tanh(brdf), jnp.tanh(local_light), viewdirs, ide], axis=-1)   # (N, 149)

    n_pad = pl.cdiv(n, tn) * tn
    x_pad = jnp.zeros((n_pad, IN_PAD), jnp.bfloat16)
    x_pad = x_pad.at[:n, :IN_MLPC].set(mlp_in.astype(jnp.bfloat16))

    row = lambda i: (i, 0)
    rep = lambda i: (0, 0)
    out = pl.pallas_call(
        _shader_kernel,
        out_shape=jax.ShapeDtypeStruct((n_pad, OUT_PAD), jnp.float32),
        grid_spec=pltpu.PrefetchScalarGridSpec(
            num_scalar_prefetch=0,
            grid=(n_pad // tn,),
            in_specs=[
                pl.BlockSpec((tn, IN_PAD), row),            # x (bf16, lane-dense)
                pl.BlockSpec((IN_PAD, FEATURE_C), rep),     # W1 (zero-padded rows, bf16)
                pl.BlockSpec((1, FEATURE_C), rep),          # b1 (f32)
                pl.BlockSpec((FEATURE_C, FEATURE_C), rep),  # W2 (bf16)
                pl.BlockSpec((1, FEATURE_C), rep),          # b2 (f32)
                pl.BlockSpec((FEATURE_C, OUT_PAD), rep),    # W3 (zero-padded cols, bf16)
            ],
            out_specs=pl.BlockSpec((tn, OUT_PAD), row),
        ),
        compiler_params=pltpu.CompilerParams(
            dimension_semantics=("parallel",),
            vmem_limit_bytes=64 << 20,
        ),
    )(x_pad, params["w1"], params["b1"], params["w2"], params["b2"], params["w3"])

    spec = out[:n, :3]
    return spec, None   # (spec_color, norm_pred=None), matching the reference


if __name__ == "__main__":
    key = jax.random.PRNGKey(0)
    k_par, k_pts, k_rough, k_view, k_brdf, k_ll = jax.random.split(key, 6)

    N = 16
    params = init_params(k_par)

    pts = jax.random.normal(k_pts, (N, 3), jnp.float32)
    roughness = jax.random.normal(k_rough, (N, 1), jnp.float32)
    v = jax.random.normal(k_view, (N, 3), jnp.float32)
    viewdirs = v / jnp.linalg.norm(v, axis=-1, keepdims=True)
    brdf = jax.random.normal(k_brdf, (N, IN_CHANNEL), jnp.float32)
    local_light = jax.random.normal(k_ll, (N, IN_CHANNEL), jnp.float32)

    spec, norm_pred = forward_shader(params, pts, roughness, viewdirs, brdf, local_light)
    jax.block_until_ready(spec)
    assert spec.shape == (N, 3) and spec.dtype == jnp.float32 and norm_pred is None
    assert bool(jnp.all(jnp.isfinite(spec)))
    assert bool(jnp.all(jnp.abs(spec) <= 1.0))   # tanh-bounded output
    print("KERNEL_OK")
</pallas_src>

<mosaic_0001>
module attributes {stable_mosaic.version = 11 : i64} {
  func.func @_shader_kernel(%arg0: i32, %arg1: memref<512x256xbf16, #tpu.memory_space<vmem>>, %arg2: memref<256x128xbf16, #tpu.memory_space<vmem>>, %arg3: memref<1x128xf32, #tpu.memory_space<vmem>>, %arg4: memref<128x128xbf16, #tpu.memory_space<vmem>>, %arg5: memref<1x128xf32, #tpu.memory_space<vmem>>, %arg6: memref<128x128xbf16, #tpu.memory_space<vmem>>, %arg7: memref<512x128xf32, #tpu.memory_space<vmem>>) attributes {dimension_semantics = [#tpu.dimension_semantics<parallel>], iteration_bounds = array<i64: 1>, scalar_prefetch = 0 : i64, scratch_operands = 0 : i64, tpu.core_type = #tpu.core_type<tc>, window_params = [{transform_indices = @transform_0, window_bounds = array<i64: 512, 256>}, {pipeline_mode = #tpu.pipeline_mode<synchronous>, transform_indices = @transform_1, window_bounds = array<i64: 256, 128>}, {pipeline_mode = #tpu.pipeline_mode<synchronous>, transform_indices = @transform_2, window_bounds = array<i64: 1, 128>}, {pipeline_mode = #tpu.pipeline_mode<synchronous>, transform_indices = @transform_3, window_bounds = array<i64: 128, 128>}, {pipeline_mode = #tpu.pipeline_mode<synchronous>, transform_indices = @transform_4, window_bounds = array<i64: 1, 128>}, {pipeline_mode = #tpu.pipeline_mode<synchronous>, transform_indices = @transform_5, window_bounds = array<i64: 128, 128>}, {transform_indices = @transform_6, window_bounds = array<i64: 512, 128>}]} {
    %c0 = arith.constant 0 : index
    %c0_0 = arith.constant 0 : index
    %0 = vector.load %arg1[%c0, %c0_0] : memref<512x256xbf16, #tpu.memory_space<vmem>>, vector<512x256xbf16>
    %c0_1 = arith.constant 0 : index
    %c0_2 = arith.constant 0 : index
    %1 = vector.load %arg2[%c0_1, %c0_2] : memref<256x128xbf16, #tpu.memory_space<vmem>>, vector<256x128xbf16>
    %cst = arith.constant dense<0.000000e+00> : vector<512x128xf32>
    %2 = tpu.matmul %0, %1, %cst {dimension_numbers = #tpu.dot_dimension_numbers<[1], [0], [0], [1], [0, 0, 1, 1], [], []>} : vector<512x256xbf16>, vector<256x128xbf16>, vector<512x128xf32> -> vector<512x128xf32>
    %c0_3 = arith.constant 0 : index
    %c0_4 = arith.constant 0 : index
    %3 = vector.load %arg3[%c0_3, %c0_4] : memref<1x128xf32, #tpu.memory_space<vmem>>, vector<1x128xf32>
    %4 = vector.broadcast %3 : vector<1x128xf32> to vector<512x128xf32>
    %5 = arith.addf %2, %4 : vector<512x128xf32>
    %cst_5 = arith.constant 0.000000e+00 : f32
    %6 = vector.broadcast %cst_5 : f32 to vector<512x128xf32>
    %7 = arith.maximumf %5, %6 : vector<512x128xf32>
    %8 = arith.truncf %7 : vector<512x128xf32> to vector<512x128xbf16>
    %c0_6 = arith.constant 0 : index
    %c0_7 = arith.constant 0 : index
    %9 = vector.load %arg4[%c0_6, %c0_7] : memref<128x128xbf16, #tpu.memory_space<vmem>>, vector<128x128xbf16>
    %cst_8 = arith.constant dense<0.000000e+00> : vector<512x128xf32>
    %10 = tpu.matmul %8, %9, %cst_8 {dimension_numbers = #tpu.dot_dimension_numbers<[1], [0], [0], [1], [0, 0, 1, 1], [], []>} : vector<512x128xbf16>, vector<128x128xbf16>, vector<512x128xf32> -> vector<512x128xf32>
    %c0_9 = arith.constant 0 : index
    %c0_10 = arith.constant 0 : index
    %11 = vector.load %arg5[%c0_9, %c0_10] : memref<1x128xf32, #tpu.memory_space<vmem>>, vector<1x128xf32>
    %12 = vector.broadcast %11 : vector<1x128xf32> to vector<512x128xf32>
    %13 = arith.addf %10, %12 : vector<512x128xf32>
    %cst_11 = arith.constant 0.000000e+00 : f32
    %14 = vector.broadcast %cst_11 : f32 to vector<512x128xf32>
    %15 = arith.maximumf %13, %14 : vector<512x128xf32>
    %16 = arith.truncf %15 : vector<512x128xf32> to vector<512x128xbf16>
    %c0_12 = arith.constant 0 : index
    %c0_13 = arith.constant 0 : index
    %17 = vector.load %arg6[%c0_12, %c0_13] : memref<128x128xbf16, #tpu.memory_space<vmem>>, vector<128x128xbf16>
    %cst_14 = arith.constant dense<0.000000e+00> : vector<512x128xf32>
    %18 = tpu.matmul %16, %17, %cst_14 {dimension_numbers = #tpu.dot_dimension_numbers<[1], [0], [0], [1], [0, 0, 1, 1], [], []>} : vector<512x128xbf16>, vector<128x128xbf16>, vector<512x128xf32> -> vector<512x128xf32>
    %19 = math.tanh %18 : vector<512x128xf32>
    %c0_15 = arith.constant 0 : index
    %c0_16 = arith.constant 0 : index
    %20 = vector.load %arg7[%c0_15, %c0_16] : memref<512x128xf32, #tpu.memory_space<vmem>>, vector<512x128xf32>
    tpu.vector_store %arg7[%c0_15, %c0_16], %19 {strides = array<i32>} : memref<512x128xf32, #tpu.memory_space<vmem>>, vector<512x128xf32>,
    return
  }
  func.func @transform_0(%arg0: i32) -> (i32, i32) {
    %c0_i32 = arith.constant 0 : i32
    %c0_i32_0 = arith.constant 0 : i32
    return %arg0, %c0_i32 : i32, i32
  }
  func.func @transform_1(%arg0: i32) -> (i32, i32) {
    %c0_i32 = arith.constant 0 : i32
    %c0_i32_0 = arith.constant 0 : i32
    %c0_i32_1 = arith.constant 0 : i32
    return %c0_i32, %c0_i32_0 : i32, i32
  }
  func.func @transform_2(%arg0: i32) -> (i32, i32) {
    %c0_i32 = arith.constant 0 : i32
    %c0_i32_0 = arith.constant 0 : i32
    %c0_i32_1 = arith.constant 0 : i32
    return %c0_i32, %c0_i32_0 : i32, i32
  }
  func.func @transform_3(%arg0: i32) -> (i32, i32) {
    %c0_i32 = arith.constant 0 : i32
    %c0_i32_0 = arith.constant 0 : i32
    %c0_i32_1 = arith.constant 0 : i32
    return %c0_i32, %c0_i32_0 : i32, i32
  }
  func.func @transform_4(%arg0: i32) -> (i32, i32) {
    %c0_i32 = arith.constant 0 : i32
    %c0_i32_0 = arith.constant 0 : i32
    %c0_i32_1 = arith.constant 0 : i32
    return %c0_i32, %c0_i32_0 : i32, i32
  }
  func.func @transform_5(%arg0: i32) -> (i32, i32) {
    %c0_i32 = arith.constant 0 : i32
    %c0_i32_0 = arith.constant 0 : i32
    %c0_i32_1 = arith.constant 0 : i32
    return %c0_i32, %c0_i32_0 : i32, i32
  }
  func.func @transform_6(%arg0: i32) -> (i32, i32) {
    %c0_i32 = arith.constant 0 : i32
    %c0_i32_0 = arith.constant 0 : i32
    return %arg0, %c0_i32 : i32, i32
  }
}

</mosaic_0001>

<llo_original>
// kernel: tpu_custom_call.1
$region0: #{tpu_custom_call.1}
  #allocation0 [shape = 'u32[]', space=smem, size = 0x4, offset = 0x4, fixed_abs, tag = 'smem constant byte address 0x4 - core index']
  #allocation1 [shape = 'u32[72,128]{1,0:T(1,128)}', space=vmem, size = 0x9000, scoped, tag = 'internal scratch']
  %s0 = inlined_call_operand.hbm [shape: bf16[512,256], index: 0, kind: input, shape index: {}]
  %s1 = inlined_call_operand.hbm [shape: bf16[256,128], index: 1, kind: input, shape index: {}]
  %s2 = inlined_call_operand.vmem [shape: f32[1,128], index: 2, kind: input, shape index: {}]
  %s3 = inlined_call_operand.hbm [shape: bf16[128,128], index: 3, kind: input, shape index: {}]
  %s4 = inlined_call_operand.vmem [shape: f32[1,128], index: 4, kind: input, shape index: {}]
  %s5 = inlined_call_operand.hbm [shape: bf16[128,128], index: 5, kind: input, shape index: {}]
  %s6 = inlined_call_operand.hbm [shape: f32[512,128], index: 6, kind: output, shape index: {}]
  %s7 = sld [smem:[#allocation0]]
  $region50: #{tpu_custom_call.1} parent=0
    _
  %s9 = ssub.s32 1, %s7
  %s10 = scalar_select 0, %s9, %s7
  $region1: #{tpu_custom_call.1} parent=0
    #allocation2 [shape = 'u8[262144]{0}', space=vmem, size = 0x40000, scoped, tag = 'input window, operand 0, single buffered']
    #allocation3 [shape = 's32[1]{0}', space=sflag, size = 0x4, scoped, tag = 'scoped memory for tpu_custom_call.1']
    #allocation4 [shape = 's32[1]{0}', space=sflag, size = 0x4, scoped, tag = 'scoped memory for tpu_custom_call.1']
    #allocation5 [shape = 'u8[65536]{0}', space=vmem, size = 0x10000, scoped, tag = 'input window, operand 1, single buffered']
    #allocation6 [shape = 's32[1]{0}', space=sflag, size = 0x4, scoped, tag = 'scoped memory for tpu_custom_call.1']
    #allocation7 [shape = 'u8[32768]{0}', space=vmem, size = 0x8000, scoped, tag = 'input window, operand 3, single buffered']
    #allocation8 [shape = 'u8[32768]{0}', space=vmem, size = 0x8000, scoped, tag = 'input window, operand 5, single buffered']
    #allocation9 [shape = 's32[1]{0}', space=sflag, size = 0x4, scoped, tag = 'scoped memory for tpu_custom_call.1']
    #allocation10 [shape = 'u8[262144]{0}', space=vmem, size = 0x40000, scoped, tag = 'output window, operand 0, single buffered']
    %11 = vsyncpa [#allocation3], 0
    %12 = vsyncpa [#allocation6], 0
    %13 = vsyncpa [#allocation9], 0
    %14 = vsyncpa [#allocation4], 0
    // Predicated region
    $region2: #{tpu_custom_call.1} parent=1 // pred_check
      _
    $region3: #{tpu_custom_call.1} parent=1 // pred_check_branch
      %16 = sbr.rel (0) target = $region5
    $region4: #{tpu_custom_call.1} parent=1 // pred_region
      %18 = vsyncadd [#allocation3], 0
      %s19 = sshll.u32 %s0, 4
      %s20 = int_to_ptr.hbm [resolvable:$true] %s19
      %s21 = sshll.u32 [#allocation2], 4
      %s22 = int_to_ptr.vmem [resolvable:$true] %s21
      %27 = dma.hbm_to_vmem [thread:$0]  %s20, 8192, %s22, [#allocation3], 128, 128, 8
    $region5: #{tpu_custom_call.1} parent=1 // pred_fallthru
      _
    // Predicated region
    $region6: #{tpu_custom_call.1} parent=1 // pred_check
      _
    $region7: #{tpu_custom_call.1} parent=1 // pred_check_branch
      %29 = sbr.rel (0) target = $region9
    $region8: #{tpu_custom_call.1} parent=1 // pred_region
      %31 = vsyncadd [#allocation6], 0
      %s32 = sshll.u32 %s1, 4
      %s33 = int_to_ptr.hbm [resolvable:$true] %s32
      %s34 = sshll.u32 [#allocation5], 4
      %s35 = int_to_ptr.vmem [resolvable:$true] %s34
      %40 = dma.hbm_to_vmem [thread:$0]  %s33, 2048, %s35, [#allocation6], 64, 64, 4
    $region9: #{tpu_custom_call.1} parent=1 // pred_fallthru
      _
    // Predicated region
    $region10: #{tpu_custom_call.1} parent=1 // pred_check
      _
    $region11: #{tpu_custom_call.1} parent=1 // pred_check_branch
      %42 = sbr.rel (0) target = $region13
    $region12: #{tpu_custom_call.1} parent=1 // pred_region
      _
    $region13: #{tpu_custom_call.1} parent=1 // pred_fallthru
      _
    // Predicated region
    $region14: #{tpu_custom_call.1} parent=1 // pred_check
      _
    $region15: #{tpu_custom_call.1} parent=1 // pred_check_branch
      %44 = sbr.rel (0) target = $region17
    $region16: #{tpu_custom_call.1} parent=1 // pred_region
      %46 = vsyncadd [#allocation6], 0
      %s47 = sshll.u32 %s3, 4
      %s48 = int_to_ptr.hbm [resolvable:$true] %s47
      %s49 = sshll.u32 [#allocation7], 4
      %s50 = int_to_ptr.vmem [resolvable:$true] %s49
      %55 = dma.hbm_to_vmem [thread:$0]  %s48, 1024, %s50, [#allocation6], 64, 64, 4
    $region17: #{tpu_custom_call.1} parent=1 // pred_fallthru
      _
    // Predicated region
    $region18: #{tpu_custom_call.1} parent=1 // pred_check
      _
    $region19: #{tpu_custom_call.1} parent=1 // pred_check_branch
      %57 = sbr.rel (0) target = $region21
    $region20: #{tpu_custom_call.1} parent=1 // pred_region
      _
    $region21: #{tpu_custom_call.1} parent=1 // pred_fallthru
      _
    // Predicated region
    $region22: #{tpu_custom_call.1} parent=1 // pred_check
      _
    $region23: #{tpu_custom_call.1} parent=1 // pred_check_branch
      %59 = sbr.rel (0) target = $region25
    $region24: #{tpu_custom_call.1} parent=1 // pred_region
      %61 = vsyncadd [#allocation9], 0
      %s62 = sshll.u32 %s5, 4
      %s63 = int_to_ptr.hbm [resolvable:$true] %s62
      %s64 = sshll.u32 [#allocation8], 4
      %s65 = int_to_ptr.vmem [resolvable:$true] %s64
      %70 = dma.hbm_to_vmem [thread:$0]  %s63, 1024, %s65, [#allocation9], 64, 64, 4
    $region25: #{tpu_custom_call.1} parent=1 // pred_fallthru
      _
    // Predicated region
    $region26: #{tpu_custom_call.1} parent=1 // pred_check
      _
    $region27: #{tpu_custom_call.1} parent=1 // pred_check_branch
      %72 = sbr.rel (0) target = $region29
    $region28: #{tpu_custom_call.1} parent=1 // pred_region
      %74 = dma.done [#allocation3], 8192
    $region29: #{tpu_custom_call.1} parent=1 // pred_fallthru
      _
    // Predicated region
    $region30: #{tpu_custom_call.1} parent=1 // pred_check
      _
    $region31: #{tpu_custom_call.1} parent=1 // pred_check_branch
      %76 = sbr.rel (0) target = $region33
    $region32: #{tpu_custom_call.1} parent=1 // pred_region
      %78 = dma.done [#allocation6], 2048
    $region33: #{tpu_custom_call.1} parent=1 // pred_fallthru
      _
    // Predicated region
    $region34: #{tpu_custom_call.1} parent=1 // pred_check
      _
    $region35: #{tpu_custom_call.1} parent=1 // pred_check_branch
      %80 = sbr.rel (0) target = $region37
    $region36: #{tpu_custom_call.1} parent=1 // pred_region
      %82 = dma.done [#allocation6], 1024
    $region37: #{tpu_custom_call.1} parent=1 // pred_fallthru
      _
    // Predicated region
    $region38: #{tpu_custom_call.1} parent=1 // pred_check
      _
    $region39: #{tpu_custom_call.1} parent=1 // pred_check_branch
      %84 = sbr.rel (0) target = $region41
    $region40: #{tpu_custom_call.1} parent=1 // pred_region
      %86 = dma.done [#allocation9], 1024
    $region41: #{tpu_custom_call.1} parent=1 // pred_fallthru
      _
    %v87 = vld [vmem:[#allocation2] sm:$0xff]
    %v88 = vld [vmem:[#allocation2 + $0x8] sm:$0xff]
    %v89 = vld [vmem:[#allocation2 + $0x10] sm:$0xff]
    %v90 = vld [vmem:[#allocation2 + $0x18] sm:$0xff]
    %v91 = vld [vmem:[#allocation2 + $0x20] sm:$0xff]
    %v92 = vld [vmem:[#allocation2 + $0x28] sm:$0xff]
    %v93 = vld [vmem:[#allocation2 + $0x30] sm:$0xff]
    %v94 = vld [vmem:[#allocation2 + $0x38] sm:$0xff]
    %v95 = vld [vmem:[#allocation2 + $0x40] sm:$0xff]
    %v96 = vld [vmem:[#allocation2 + $0x48] sm:$0xff]
    %v97 = vld [vmem:[#allocation2 + $0x50] sm:$0xff]
    %v98 = vld [vmem:[#allocation2 + $0x58] sm:$0xff]
    %v99 = vld [vmem:[#allocation2 + $0x60] sm:$0xff]
    %v100 = vld [vmem:[#allocation2 + $0x68] sm:$0xff]
    %v101 = vld [vmem:[#allocation2 + $0x70] sm:$0xff]
    %v102 = vld [vmem:[#allocation2 + $0x78] sm:$0xff]
    %v103 = vld [vmem:[#allocation2 + $0x80] sm:$0xff]
    %v104 = vld [vmem:[#allocation2 + $0x88] sm:$0xff]
    %v105 = vld [vmem:[#allocation2 + $0x90] sm:$0xff]
    %v106 = vld [vmem:[#allocation2 + $0x98] sm:$0xff]
    %v107 = vld [vmem:[#allocation2 + $0xa0] sm:$0xff]
    %v108 = vld [vmem:[#allocation2 + $0xa8] sm:$0xff]
    %v109 = vld [vmem:[#allocation2 + $0xb0] sm:$0xff]
    %v110 = vld [vmem:[#allocation2 + $0xb8] sm:$0xff]
    %v111 = vld [vmem:[#allocation2 + $0xc0] sm:$0xff]
    %v112 = vld [vmem:[#allocation2 + $0xc8] sm:$0xff]
    %v113 = vld [vmem:[#allocation2 + $0xd0] sm:$0xff]
    %v114 = vld [vmem:[#allocation2 + $0xd8] sm:$0xff]
    %v115 = vld [vmem:[#allocation2 + $0xe0] sm:$0xff]
    %v116 = vld [vmem:[#allocation2 + $0xe8] sm:$0xff]
    %v117 = vld [vmem:[#allocation2 + $0xf0] sm:$0xff]
    %v118 = vld [vmem:[#allocation2 + $0xf8] sm:$0xff]
    %v119 = vld [vmem:[#allocation2 + $0x100] sm:$0xff]
    %v120 = vld [vmem:[#allocation2 + $0x108] sm:$0xff]
    %v121 = vld [vmem:[#allocation2 + $0x110] sm:$0xff]
    %v122 = vld [vmem:[#allocation2 + $0x118] sm:$0xff]
    %v123 = vld [vmem:[#allocation2 + $0x120] sm:$0xff]
    %v124 = vld [vmem:[#allocation2 + $0x128] sm:$0xff]
    %v125 = vld [vmem:[#allocation2 + $0x130] sm:$0xff]
    %v126 = vld [vmem:[#allocation2 + $0x138] sm:$0xff]
    %v127 = vld [vmem:[#allocation2 + $0x140] sm:$0xff]
    %v128 = vld [vmem:[#allocation2 + $0x148] sm:$0xff]
    %v129 = vld [vmem:[#allocation2 + $0x150] sm:$0xff]
    %v130 = vld [vmem:[#allocation2 + $0x158] sm:$0xff]
    %v131 = vld [vmem:[#allocation2 + $0x160] sm:$0xff]
    %v132 = vld [vmem:[#allocation2 + $0x168] sm:$0xff]
    %v133 = vld [vmem:[#allocation2 + $0x170] sm:$0xff]
    %v134 = vld [vmem:[#allocation2 + $0x178] sm:$0xff]
    %v135 = vld [vmem:[#allocation2 + $0x180] sm:$0xff]
    %v136 = vld [vmem:[#allocation2 + $0x188] sm:$0xff]
    %v137 = vld [vmem:[#allocation2 + $0x190] sm:$0xff]
    %v138 = vld [vmem:[#allocation2 + $0x198] sm:$0xff]
    %v139 = vld [vmem:[#allocation2 + $0x1a0] sm:$0xff]
    %v140 = vld [vmem:[#allocation2 + $0x1a8] sm:$0xff]
    %v141 = vld [vmem:[#allocation2 + $0x1b0] sm:$0xff]
    %v142 = vld [vmem:[#allocation2 + $0x1b8] sm:$0xff]
    %v143 = vld [vmem:[#allocation2 + $0x1c0] sm:$0xff]
    %v144 = vld [vmem:[#allocation2 + $0x1c8] sm:$0xff]
    %v145 = vld [vmem:[#allocation2 + $0x1d0] sm:$0xff]
    %v146 = vld [vmem:[#allocation2 + $0x1d8] sm:$0xff]
    %v147 = vld [vmem:[#allocation2 + $0x1e0] sm:$0xff]
    %v148 = vld [vmem:[#allocation2 + $0x1e8] sm:$0xff]
    %v149 = vld [vmem:[#allocation2 + $0x1f0] sm:$0xff]
    %v150 = vld [vmem:[#allocation2 + $0x1f8] sm:$0xff]
    %v151 = vld [vmem:[#allocation5] sm:$0xf]
    %v152 = vld [vmem:[#allocation5 + $0x4] sm:$0xf]
    %v153 = vld [vmem:[#allocation5 + $0x8] sm:$0xf]
    %v154 = vld [vmem:[#allocation5 + $0xc] sm:$0xf]
    %v155 = vld [vmem:[#allocation5 + $0x10] sm:$0xf]
    %v156 = vld [vmem:[#allocation5 + $0x14] sm:$0xf]
    %v157 = vld [vmem:[#allocation5 + $0x18] sm:$0xf]
    %v158 = vld [vmem:[#allocation5 + $0x1c] sm:$0xf]
    %v159 = vld [vmem:[#allocation5 + $0x20] sm:$0xf]
    %v160 = vld [vmem:[#allocation5 + $0x24] sm:$0xf]
    %v161 = vld [vmem:[#allocation5 + $0x28] sm:$0xf]
    %v162 = vld [vmem:[#allocation5 + $0x2c] sm:$0xf]
    %v163 = vld [vmem:[#allocation5 + $0x30] sm:$0xf]
    %v164 = vld [vmem:[#allocation5 + $0x34] sm:$0xf]
    %v165 = vld [vmem:[#allocation5 + $0x38] sm:$0xf]
    %v166 = vld [vmem:[#allocation5 + $0x3c] sm:$0xf]
    %v167 = vld [vmem:[#allocation5 + $0x40] sm:$0xf]
    %v168 = vld [vmem:[#allocation5 + $0x44] sm:$0xf]
    %v169 = vld [vmem:[#allocation5 + $0x48] sm:$0xf]
    %v170 = vld [vmem:[#allocation5 + $0x4c] sm:$0xf]
    %v171 = vld [vmem:[#allocation5 + $0x50] sm:$0xf]
    %v172 = vld [vmem:[#allocation5 + $0x54] sm:$0xf]
    %v173 = vld [vmem:[#allocation5 + $0x58] sm:$0xf]
    %v174 = vld [vmem:[#allocation5 + $0x5c] sm:$0xf]
    %v175 = vld [vmem:[#allocation5 + $0x60] sm:$0xf]
    %v176 = vld [vmem:[#allocation5 + $0x64] sm:$0xf]
    %v177 = vld [vmem:[#allocation5 + $0x68] sm:$0xf]
    %v178 = vld [vmem:[#allocation5 + $0x6c] sm:$0xf]
    %v179 = vld [vmem:[#allocation5 + $0x70] sm:$0xf]
    %v180 = vld [vmem:[#allocation5 + $0x74] sm:$0xf]
    %v181 = vld [vmem:[#allocation5 + $0x78] sm:$0xf]
    %v182 = vld [vmem:[#allocation5 + $0x7c] sm:$0xf]
    %v183 = vld [vmem:[%s2] sm:$0x1]
    %v185 = vperm.slane %v183, 0
    %v251 = vunpack.c.l.b16 %v87
    %v252 = vunpack.c.h.b16 %v87
    %v253 = vunpack.c.l.b16 %v88
    %v254 = vunpack.c.h.b16 %v88
    %v255 = vunpack.c.l.b16 %v89
    %v256 = vunpack.c.h.b16 %v89
    %v257 = vunpack.c.l.b16 %v90
    %v258 = vunpack.c.h.b16 %v90
    %v259 = vunpack.c.l.b16 %v91
    %v260 = vunpack.c.h.b16 %v91
    %v261 = vunpack.c.l.b16 %v92
    %v262 = vunpack.c.h.b16 %v92
    %v263 = vunpack.c.l.b16 %v93
    %v264 = vunpack.c.h.b16 %v93
    %v265 = vunpack.c.l.b16 %v94
    %v266 = vunpack.c.h.b16 %v94
    %v267 = vunpack.c.l.b16 %v95
    %v268 = vunpack.c.h.b16 %v95
    %v269 = vunpack.c.l.b16 %v96
    %v270 = vunpack.c.h.b16 %v96
    %v271 = vunpack.c.l.b16 %v97
    %v272 = vunpack.c.h.b16 %v97
    %v273 = vunpack.c.l.b16 %v98
    %v274 = vunpack.c.h.b16 %v98
    %v275 = vunpack.c.l.b16 %v99
    %v276 = vunpack.c.h.b16 %v99
    %v277 = vunpack.c.l.b16 %v100
    %v278 = vunpack.c.h.b16 %v100
    %v279 = vunpack.c.l.b16 %v101
    %v280 = vunpack.c.h.b16 %v101
    %v281 = vunpack.c.l.b16 %v102
    %v282 = vunpack.c.h.b16 %v102
    %v283 = vunpack.c.l.b16 %v103
    %v284 = vunpack.c.h.b16 %v103
    %v285 = vunpack.c.l.b16 %v104
    %v286 = vunpack.c.h.b16 %v104
    %v287 = vunpack.c.l.b16 %v105
    %v288 = vunpack.c.h.b16 %v105
    %v289 = vunpack.c.l.b16 %v106
    %v290 = vunpack.c.h.b16 %v106
    %v291 = vunpack.c.l.b16 %v107
    %v292 = vunpack.c.h.b16 %v107
    %v293 = vunpack.c.l.b16 %v108
    %v294 = vunpack.c.h.b16 %v108
    %v295 = vunpack.c.l.b16 %v109
    %v296 = vunpack.c.h.b16 %v109
    %v297 = vunpack.c.l.b16 %v110
    %v298 = vunpack.c.h.b16 %v110
    %v299 = vunpack.c.l.b16 %v111
    %v300 = vunpack.c.h.b16 %v111
    %v301 = vunpack.c.l.b16 %v112
    %v302 = vunpack.c.h.b16 %v112
    %v303 = vunpack.c.l.b16 %v113
    %v304 = vunpack.c.h.b16 %v113
    %v305 = vunpack.c.l.b16 %v114
    %v306 = vunpack.c.h.b16 %v114
    %v307 = vunpack.c.l.b16 %v115
    %v308 = vunpack.c.h.b16 %v115
    %v309 = vunpack.c.l.b16 %v116
    %v310 = vunpack.c.h.b16 %v116
    %v311 = vunpack.c.l.b16 %v117
    %v312 = vunpack.c.h.b16 %v117
    %v313 = vunpack.c.l.b16 %v118
    %v314 = vunpack.c.h.b16 %v118
    %v315 = vunpack.c.l.b16 %v119
    %v316 = vunpack.c.h.b16 %v119
    %v317 = vunpack.c.l.b16 %v120
    %v318 = vunpack.c.h.b16 %v120
    %v319 = vunpack.c.l.b16 %v121
    %v320 = vunpack.c.h.b16 %v121
    %v321 = vunpack.c.l.b16 %v122
    %v322 = vunpack.c.h.b16 %v122
    %v323 = vunpack.c.l.b16 %v123
    %v324 = vunpack.c.h.b16 %v123
    %v325 = vunpack.c.l.b16 %v124
    %v326 = vunpack.c.h.b16 %v124
    %v327 = vunpack.c.l.b16 %v125
    %v328 = vunpack.c.h.b16 %v125
    %v329 = vunpack.c.l.b16 %v126
    %v330 = vunpack.c.h.b16 %v126
    %v331 = vunpack.c.l.b16 %v127
    %v332 = vunpack.c.h.b16 %v127
    %v333 = vunpack.c.l.b16 %v128
    %v334 = vunpack.c.h.b16 %v128
    %v335 = vunpack.c.l.b16 %v129
    %v336 = vunpack.c.h.b16 %v129
    %v337 = vunpack.c.l.b16 %v130
    %v338 = vunpack.c.h.b16 %v130
    %v339 = vunpack.c.l.b16 %v131
    %v340 = vunpack.c.h.b16 %v131
    %v341 = vunpack.c.l.b16 %v132
    %v342 = vunpack.c.h.b16 %v132
    %v343 = vunpack.c.l.b16 %v133
    %v344 = vunpack.c.h.b16 %v133
    %v345 = vunpack.c.l.b16 %v134
    %v346 = vunpack.c.h.b16 %v134
    %v347 = vunpack.c.l.b16 %v135
    %v348 = vunpack.c.h.b16 %v135
    %v349 = vunpack.c.l.b16 %v136
    %v350 = vunpack.c.h.b16 %v136
    %v351 = vunpack.c.l.b16 %v137
    %v352 = vunpack.c.h.b16 %v137
    %v353 = vunpack.c.l.b16 %v138
    %v354 = vunpack.c.h.b16 %v138
    %v355 = vunpack.c.l.b16 %v139
    %v356 = vunpack.c.h.b16 %v139
    %v357 = vunpack.c.l.b16 %v140
    %v358 = vunpack.c.h.b16 %v140
    %v359 = vunpack.c.l.b16 %v141
    %v360 = vunpack.c.h.b16 %v141
    %v361 = vunpack.c.l.b16 %v142
    %v362 = vunpack.c.h.b16 %v142
    %v363 = vunpack.c.l.b16 %v143
    %v364 = vunpack.c.h.b16 %v143
    %v365 = vunpack.c.l.b16 %v144
    %v366 = vunpack.c.h.b16 %v144
    %v367 = vunpack.c.l.b16 %v145
    %v368 = vunpack.c.h.b16 %v145
    %v369 = vunpack.c.l.b16 %v146
    %v370 = vunpack.c.h.b16 %v146
    %v371 = vunpack.c.l.b16 %v147
    %v372 = vunpack.c.h.b16 %v147
    %v373 = vunpack.c.l.b16 %v148
    %v374 = vunpack.c.h.b16 %v148
    %v375 = vunpack.c.l.b16 %v149
    %v376 = vunpack.c.h.b16 %v149
    %v377 = vunpack.c.l.b16 %v150
    %v378 = vunpack.c.h.b16 %v150
    %v379 = vpack.c.b16 %v253, %v251
    %v380 = vpack.c.b16 %v254, %v252
    %v381 = vpack.c.b16 %v257, %v255
    %v382 = vpack.c.b16 %v258, %v256
    %v383 = vpack.c.b16 %v261, %v259
    %v384 = vpack.c.b16 %v262, %v260
    %v385 = vpack.c.b16 %v265, %v263
    %v386 = vpack.c.b16 %v266, %v264
    %v387 = vpack.c.b16 %v269, %v267
    %v388 = vpack.c.b16 %v270, %v268
    %v389 = vpack.c.b16 %v273, %v271
    %v390 = vpack.c.b16 %v274, %v272
    %v391 = vpack.c.b16 %v277, %v275
    %v392 = vpack.c.b16 %v278, %v276
    %v393 = vpack.c.b16 %v281, %v279
    %v394 = vpack.c.b16 %v282, %v280
    %v395 = vpack.c.b16 %v285, %v283
    %v396 = vpack.c.b16 %v286, %v284
    %v397 = vpack.c.b16 %v289, %v287
    %v398 = vpack.c.b16 %v290, %v288
    %v399 = vpack.c.b16 %v293, %v291
    %v400 = vpack.c.b16 %v294, %v292
    %v401 = vpack.c.b16 %v297, %v295
    %v402 = vpack.c.b16 %v298, %v296
    %v403 = vpack.c.b16 %v301, %v299
    %v404 = vpack.c.b16 %v302, %v300
    %v405 = vpack.c.b16 %v305, %v303
    %v406 = vpack.c.b16 %v306, %v304
    %v407 = vpack.c.b16 %v309, %v307
    %v408 = vpack.c.b16 %v310, %v308
    %v409 = vpack.c.b16 %v313, %v311
    %v410 = vpack.c.b16 %v314, %v312
    %v411 = vpack.c.b16 %v317, %v315
    %v412 = vpack.c.b16 %v318, %v316
    %v413 = vpack.c.b16 %v321, %v319
    %v414 = vpack.c.b16 %v322, %v320
    %v415 = vpack.c.b16 %v325, %v323
    %v416 = vpack.c.b16 %v326, %v324
    %v417 = vpack.c.b16 %v329, %v327
    %v418 = vpack.c.b16 %v330, %v328
    %v419 = vpack.c.b16 %v333, %v331
    %v420 = vpack.c.b16 %v334, %v332
    %v421 = vpack.c.b16 %v337, %v335
    %v422 = vpack.c.b16 %v338, %v336
    %v423 = vpack.c.b16 %v341, %v339
    %v424 = vpack.c.b16 %v342, %v340
    %v425 = vpack.c.b16 %v345, %v343
    %v426 = vpack.c.b16 %v346, %v344
    %v427 = vpack.c.b16 %v349, %v347
    %v428 = vpack.c.b16 %v350, %v348
    %v429 = vpack.c.b16 %v353, %v351
    %v430 = vpack.c.b16 %v354, %v352
    %v431 = vpack.c.b16 %v357, %v355
    %v432 = vpack.c.b16 %v358, %v356
    %v433 = vpack.c.b16 %v361, %v359
    %v434 = vpack.c.b16 %v362, %v360
    %v435 = vpack.c.b16 %v365, %v363
    %v436 = vpack.c.b16 %v366, %v364
    %v437 = vpack.c.b16 %v369, %v367
    %v438 = vpack.c.b16 %v370, %v368
    %v439 = vpack.c.b16 %v373, %v371
    %v440 = vpack.c.b16 %v374, %v372
    %v441 = vpack.c.b16 %v377, %v375
    %v442 = vpack.c.b16 %v378, %v376
    %v539 = vunpack.c.l.b16 %v151
    %v540 = vunpack.c.l.b16 %v152
    %v541 = vunpack.c.l.b16 %v153
    %v542 = vunpack.c.l.b16 %v154
    %v543 = vunpack.c.l.b16 %v155
    %v544 = vunpack.c.l.b16 %v156
    %v545 = vunpack.c.l.b16 %v157
    %v546 = vunpack.c.l.b16 %v158
    %v547 = vunpack.c.l.b16 %v159
    %v548 = vunpack.c.l.b16 %v160
    %v549 = vunpack.c.l.b16 %v161
    %v550 = vunpack.c.l.b16 %v162
    %v551 = vunpack.c.l.b16 %v163
    %v552 = vunpack.c.l.b16 %v164
    %v553 = vunpack.c.l.b16 %v165
    %v554 = vunpack.c.l.b16 %v166
    %v555 = vunpack.c.l.b16 %v167
    %v556 = vunpack.c.l.b16 %v168
    %v557 = vunpack.c.l.b16 %v169
    %v558 = vunpack.c.l.b16 %v170
    %v559 = vunpack.c.l.b16 %v171
    %v560 = vunpack.c.l.b16 %v172
    %v561 = vunpack.c.l.b16 %v173
    %v562 = vunpack.c.l.b16 %v174
    %v563 = vunpack.c.l.b16 %v175
    %v564 = vunpack.c.l.b16 %v176
    %v565 = vunpack.c.l.b16 %v177
    %v566 = vunpack.c.l.b16 %v178
    %v567 = vunpack.c.l.b16 %v179
    %v568 = vunpack.c.l.b16 %v180
    %v569 = vunpack.c.l.b16 %v181
    %v570 = vunpack.c.l.b16 %v182
    %v571 = vpack.c.b16 %v540, %v539
    %v572 = vpack.c.b16 %v542, %v541
    %v573 = vpack.c.b16 %v544, %v543
    %v574 = vpack.c.b16 %v546, %v545
    %v575 = vpack.c.b16 %v548, %v547
    %v576 = vpack.c.b16 %v550, %v549
    %v577 = vpack.c.b16 %v552, %v551
    %v578 = vpack.c.b16 %v554, %v553
    %v579 = vpack.c.b16 %v556, %v555
    %v580 = vpack.c.b16 %v558, %v557
    %v581 = vpack.c.b16 %v560, %v559
    %v582 = vpack.c.b16 %v562, %v561
    %v583 = vpack.c.b16 %v564, %v563
    %v584 = vpack.c.b16 %v566, %v565
    %v585 = vpack.c.b16 %v568, %v567
    %v586 = vpack.c.b16 %v570, %v569
    %603 = vmatpush.bf16.msra.mxu0 %v578
    %604 = vmatpush.bf16.msra.mxu0 %v577
    %605 = vmatpush.bf16.msra.mxu0 %v576
    %606 = vmatpush.bf16.msra.mxu0 %v575
    %607 = vmatpush.bf16.msra.mxu0 %v574
    %608 = vmatpush.bf16.msra.mxu0 %v573
    %609 = vmatpush.bf16.msra.mxu0 %v572
    %610 = vmatpush.bf16.msra.mxu0 %v571
    %611 = vmatmul.bf16.gmra.mxu0 %v379
    %v612 = vpop.f32.mrf.mxu0
    %v613 = vadd.f32 %v185, %v612
    %v614 = vpop.f32.mrf.mxu0
    %v615 = vadd.f32 %v185, %v614
    %616 = vmatmul.bf16.gmra.mxu0 %v381
    %v617 = vpop.f32.mrf.mxu0
    %v618 = vadd.f32 %v185, %v617
    %v619 = vpop.f32.mrf.mxu0
    %v620 = vadd.f32 %v185, %v619
    %621 = vmatmul.bf16.gmra.mxu0 %v383
    %v622 = vpop.f32.mrf.mxu0
    %v623 = vadd.f32 %v185, %v622
    %v624 = vpop.f32.mrf.mxu0
    %v625 = vadd.f32 %v185, %v624
    %626 = vmatmul.bf16.gmra.mxu0 %v385
    %v627 = vpop.f32.mrf.mxu0
    %v628 = vadd.f32 %v185, %v627
    %v629 = vpop.f32.mrf.mxu0
    %v630 = vadd.f32 %v185, %v629
    %631 = vmatmul.bf16.gmra.mxu0 %v387
    %v632 = vpop.f32.mrf.mxu0
    %v633 = vadd.f32 %v185, %v632
    %v634 = vpop.f32.mrf.mxu0
    %v635 = vadd.f32 %v185, %v634
    %636 = vmatmul.bf16.gmra.mxu0 %v389
    %v637 = vpop.f32.mrf.mxu0
    %v638 = vadd.f32 %v185, %v637
    %v639 = vpop.f32.mrf.mxu0
    %v640 = vadd.f32 %v185, %v639
    %641 = vmatmul.bf16.gmra.mxu0 %v391
    %v642 = vpop.f32.mrf.mxu0
    %v643 = vadd.f32 %v185, %v642
    %v644 = vpop.f32.mrf.mxu0
    %v645 = vadd.f32 %v185, %v644
    %646 = vmatmul.bf16.gmra.mxu0 %v393
    %v647 = vpop.f32.mrf.mxu0
    %v648 = vadd.f32 %v185, %v647
    %v649 = vpop.f32.mrf.mxu0
    %v650 = vadd.f32 %v185, %v649
    %651 = vmatmul.bf16.gmra.mxu0 %v395
    %v652 = vpop.f32.mrf.mxu0
    %v653 = vadd.f32 %v185, %v652
    %v654 = vpop.f32.mrf.mxu0
    %v655 = vadd.f32 %v185, %v654
    %656 = vmatmul.bf16.gmra.mxu0 %v397
    %v657 = vpop.f32.mrf.mxu0
    %v658 = vadd.f32 %v185, %v657
    %v659 = vpop.f32.mrf.mxu0
    %v660 = vadd.f32 %v185, %v659
    %661 = vmatmul.bf16.gmra.mxu0 %v399
    %v662 = vpop.f32.mrf.mxu0
    %v663 = vadd.f32 %v185, %v662
    %v664 = vpop.f32.mrf.mxu0
    %v665 = vadd.f32 %v185, %v664
    %666 = vmatmul.bf16.gmra.mxu0 %v401
    %v667 = vpop.f32.mrf.mxu0
    %v668 = vadd.f32 %v185, %v667
    %v669 = vpop.f32.mrf.mxu0
    %v670 = vadd.f32 %v185, %v669
    %671 = vmatmul.bf16.gmra.mxu0 %v403
    %v672 = vpop.f32.mrf.mxu0
    %v673 = vadd.f32 %v185, %v672
    %v674 = vpop.f32.mrf.mxu0
    %v675 = vadd.f32 %v185, %v674
    %676 = vmatmul.bf16.gmra.mxu0 %v405
    %v677 = vpop.f32.mrf.mxu0
    %v678 = vadd.f32 %v185, %v677
    %v679 = vpop.f32.mrf.mxu0
    %v680 = vadd.f32 %v185, %v679
    %681 = vmatmul.bf16.gmra.mxu0 %v407
    %v682 = vpop.f32.mrf.mxu0
    %v683 = vadd.f32 %v185, %v682
    %v684 = vpop.f32.mrf.mxu0
    %v685 = vadd.f32 %v185, %v684
    %686 = vmatmul.bf16.gmra.mxu0 %v409
    %v687 = vpop.f32.mrf.mxu0
    %v688 = vadd.f32 %v185, %v687
    %v689 = vpop.f32.mrf.mxu0
    %v690 = vadd.f32 %v185, %v689
    %691 = vmatmul.bf16.gmra.mxu0 %v411
    %v692 = vpop.f32.mrf.mxu0
    %v693 = vadd.f32 %v185, %v692
    %v694 = vpop.f32.mrf.mxu0
    %v695 = vadd.f32 %v185, %v694
    %696 = vmatmul.bf16.gmra.mxu0 %v413
    %v697 = vpop.f32.mrf.mxu0
    %v698 = vadd.f32 %v185, %v697
    %v699 = vpop.f32.mrf.mxu0
    %v700 = vadd.f32 %v185, %v699
    %701 = vmatmul.bf16.gmra.mxu0 %v415
    %v702 = vpop.f32.mrf.mxu0
    %v703 = vadd.f32 %v185, %v702
    %v704 = vpop.f32.mrf.mxu0
    %v705 = vadd.f32 %v185, %v704
    %706 = vmatmul.bf16.gmra.mxu0 %v417
    %v707 = vpop.f32.mrf.mxu0
    %v708 = vadd.f32 %v185, %v707
    %v709 = vpop.f32.mrf.mxu0
    %v710 = vadd.f32 %v185, %v709
    %711 = vmatmul.bf16.gmra.mxu0 %v419
    %v712 = vpop.f32.mrf.mxu0
    %v713 = vadd.f32 %v185, %v712
    %v714 = vpop.f32.mrf.mxu0
    %v715 = vadd.f32 %v185, %v714
    %716 = vmatmul.bf16.gmra.mxu0 %v421
    %v717 = vpop.f32.mrf.mxu0
    %v718 = vadd.f32 %v185, %v717
    %v719 = vpop.f32.mrf.mxu0
    %v720 = vadd.f32 %v185, %v719
    %721 = vmatmul.bf16.gmra.mxu0 %v423
    %v722 = vpop.f32.mrf.mxu0
    %v723 = vadd.f32 %v185, %v722
    %v724 = vpop.f32.mrf.mxu0
    %v725 = vadd.f32 %v185, %v724
    %726 = vmatmul.bf16.gmra.mxu0 %v425
    %v727 = vpop.f32.mrf.mxu0
    %v728 = vadd.f32 %v185, %v727
    %v729 = vpop.f32.mrf.mxu0
    %v730 = vadd.f32 %v185, %v729
    %731 = vmatmul.bf16.gmra.mxu0 %v427
    %v732 = vpop.f32.mrf.mxu0
    %v733 = vadd.f32 %v185, %v732
    %v734 = vpop.f32.mrf.mxu0
    %v735 = vadd.f32 %v185, %v734
    %736 = vmatmul.bf16.gmra.mxu0 %v429
    %v737 = vpop.f32.mrf.mxu0
    %v738 = vadd.f32 %v185, %v737
    %v739 = vpop.f32.mrf.mxu0
    %v740 = vadd.f32 %v185, %v739
    %741 = vmatmul.bf16.gmra.mxu0 %v431
    %v742 = vpop.f32.mrf.mxu0
    %v743 = vadd.f32 %v185, %v742
    %v744 = vpop.f32.mrf.mxu0
    %v745 = vadd.f32 %v185, %v744
    %746 = vmatmul.bf16.gmra.mxu0 %v433
    %v747 = vpop.f32.mrf.mxu0
    %v748 = vadd.f32 %v185, %v747
    %v749 = vpop.f32.mrf.mxu0
    %v750 = vadd.f32 %v185, %v749
    %751 = vmatmul.bf16.gmra.mxu0 %v435
    %v752 = vpop.f32.mrf.mxu0
    %v753 = vadd.f32 %v185, %v752
    %v754 = vpop.f32.mrf.mxu0
    %v755 = vadd.f32 %v185, %v754
    %756 = vmatmul.bf16.gmra.mxu0 %v437
    %v757 = vpop.f32.mrf.mxu0
    %v758 = vadd.f32 %v185, %v757
    %v759 = vpop.f32.mrf.mxu0
    %v760 = vadd.f32 %v185, %v759
    %761 = vmatmul.bf16.gmra.mxu0 %v439
    %v762 = vpop.f32.mrf.mxu0
    %v763 = vadd.f32 %v185, %v762
    %v764 = vpop.f32.mrf.mxu0
    %v765 = vadd.f32 %v185, %v764
    %766 = vmatmul.bf16.gmra.mxu0 %v441
    %v767 = vpop.f32.mrf.mxu0
    %v768 = vadd.f32 %v185, %v767
    %v769 = vpop.f32.mrf.mxu0
    %v770 = vadd.f32 %v185, %v769
    %771 = vdwg.mxu0
    %772 = vmatpush.bf16.msra.mxu0 %v586
    %773 = vmatpush.bf16.msra.mxu0 %v585
    %774 = vmatpush.bf16.msra.mxu0 %v584
    %775 = vmatpush.bf16.msra.mxu0 %v583
    %776 = vmatpush.bf16.msra.mxu0 %v582
    %777 = vmatpush.bf16.msra.mxu0 %v581
    %778 = vmatpush.bf16.msra.mxu0 %v580
    %779 = vmatpush.bf16.msra.mxu0 %v579
    %780 = vmatmul.bf16.gmra.mxu0 %v380
    %v781 = vpop.f32.mrf.mxu0
    %v782 = vadd.f32 %v613, %v781
    %v783 = vpop.f32.mrf.mxu0
    %v784 = vadd.f32 %v615, %v783
    %785 = vmatmul.bf16.gmra.mxu0 %v382
    %v786 = vpop.f32.mrf.mxu0
    %v787 = vadd.f32 %v618, %v786
    %v788 = vpop.f32.mrf.mxu0
    %v789 = vadd.f32 %v620, %v788
    %790 = vmatmul.bf16.gmra.mxu0 %v384
    %v791 = vpop.f32.mrf.mxu0
    %v792 = vadd.f32 %v623, %v791
    %v793 = vpop.f32.mrf.mxu0
    %v794 = vadd.f32 %v625, %v793
    %795 = vmatmul.bf16.gmra.mxu0 %v386
    %v796 = vpop.f32.mrf.mxu0
    %v797 = vadd.f32 %v628, %v796
    %v798 = vpop.f32.mrf.mxu0
    %v799 = vadd.f32 %v630, %v798
    %800 = vmatmul.bf16.gmra.mxu0 %v388
    %v801 = vpop.f32.mrf.mxu0
    %v802 = vadd.f32 %v633, %v801
    %v803 = vpop.f32.mrf.mxu0
    %v804 = vadd.f32 %v635, %v803
    %805 = vmatmul.bf16.gmra.mxu0 %v390
    %v806 = vpop.f32.mrf.mxu0
    %v807 = vadd.f32 %v638, %v806
    %v808 = vpop.f32.mrf.mxu0
    %v809 = vadd.f32 %v640, %v808
    %810 = vmatmul.bf16.gmra.mxu0 %v392
    %v811 = vpop.f32.mrf.mxu0
    %v812 = vadd.f32 %v643, %v811
    %v813 = vpop.f32.mrf.mxu0
    %v814 = vadd.f32 %v645, %v813
    %815 = vmatmul.bf16.gmra.mxu0 %v394
    %v816 = vpop.f32.mrf.mxu0
    %v817 = vadd.f32 %v648, %v816
    %v818 = vpop.f32.mrf.mxu0
    %v819 = vadd.f32 %v650, %v818
    %820 = vmatmul.bf16.gmra.mxu0 %v396
    %v821 = vpop.f32.mrf.mxu0
    %v822 = vadd.f32 %v653, %v821
    %v823 = vpop.f32.mrf.mxu0
    %v824 = vadd.f32 %v655, %v823
    %825 = vmatmul.bf16.gmra.mxu0 %v398
    %v826 = vpop.f32.mrf.mxu0
    %v827 = vadd.f32 %v658, %v826
    %v828 = vpop.f32.mrf.mxu0
    %v829 = vadd.f32 %v660, %v828
    %830 = vmatmul.bf16.gmra.mxu0 %v400
    %v831 = vpop.f32.mrf.mxu0
    %v832 = vadd.f32 %v663, %v831
    %v833 = vpop.f32.mrf.mxu0
    %v834 = vadd.f32 %v665, %v833
    %835 = vmatmul.bf16.gmra.mxu0 %v402
    %v836 = vpop.f32.mrf.mxu0
    %v837 = vadd.f32 %v668, %v836
    %v838 = vpop.f32.mrf.mxu0
    %v839 = vadd.f32 %v670, %v838
    %840 = vmatmul.bf16.gmra.mxu0 %v404
    %v841 = vpop.f32.mrf.mxu0
    %v842 = vadd.f32 %v673, %v841
    %v843 = vpop.f32.mrf.mxu0
    %v844 = vadd.f32 %v675, %v843
    %845 = vmatmul.bf16.gmra.mxu0 %v406
    %v846 = vpop.f32.mrf.mxu0
    %v847 = vadd.f32 %v678, %v846
    %v848 = vpop.f32.mrf.mxu0
    %v849 = vadd.f32 %v680, %v848
    %850 = vmatmul.bf16.gmra.mxu0 %v408
    %v851 = vpop.f32.mrf.mxu0
    %v852 = vadd.f32 %v683, %v851
    %v853 = vpop.f32.mrf.mxu0
    %v854 = vadd.f32 %v685, %v853
    %855 = vmatmul.bf16.gmra.mxu0 %v410
    %v856 = vpop.f32.mrf.mxu0
    %v857 = vadd.f32 %v688, %v856
    %v858 = vpop.f32.mrf.mxu0
    %v859 = vadd.f32 %v690, %v858
    %860 = vmatmul.bf16.gmra.mxu0 %v412
    %v861 = vpop.f32.mrf.mxu0
    %v862 = vadd.f32 %v693, %v861
    %v863 = vpop.f32.mrf.mxu0
    %v864 = vadd.f32 %v695, %v863
    %865 = vmatmul.bf16.gmra.mxu0 %v414
    %v866 = vpop.f32.mrf.mxu0
    %v867 = vadd.f32 %v698, %v866
    %v868 = vpop.f32.mrf.mxu0
    %v869 = vadd.f32 %v700, %v868
    %870 = vmatmul.bf16.gmra.mxu0 %v416
    %v871 = vpop.f32.mrf.mxu0
    %v872 = vadd.f32 %v703, %v871
    %v873 = vpop.f32.mrf.mxu0
    %v874 = vadd.f32 %v705, %v873
    %875 = vmatmul.bf16.gmra.mxu0 %v418
    %v876 = vpop.f32.mrf.mxu0
    %v877 = vadd.f32 %v708, %v876
    %v878 = vpop.f32.mrf.mxu0
    %v879 = vadd.f32 %v710, %v878
    %880 = vmatmul.bf16.gmra.mxu0 %v420
    %v881 = vpop.f32.mrf.mxu0
    %v882 = vadd.f32 %v713, %v881
    %v883 = vpop.f32.mrf.mxu0
    %v884 = vadd.f32 %v715, %v883
    %885 = vmatmul.bf16.gmra.mxu0 %v422
    %v886 = vpop.f32.mrf.mxu0
    %v887 = vadd.f32 %v718, %v886
    %v888 = vpop.f32.mrf.mxu0
    %v889 = vadd.f32 %v720, %v888
    %890 = vmatmul.bf16.gmra.mxu0 %v424
    %v891 = vpop.f32.mrf.mxu0
    %v892 = vadd.f32 %v723, %v891
    %v893 = vpop.f32.mrf.mxu0
    %v894 = vadd.f32 %v725, %v893
    %895 = vmatmul.bf16.gmra.mxu0 %v426
    %v896 = vpop.f32.mrf.mxu0
    %v897 = vadd.f32 %v728, %v896
    %v898 = vpop.f32.mrf.mxu0
    %v899 = vadd.f32 %v730, %v898
    %900 = vmatmul.bf16.gmra.mxu0 %v428
    %v901 = vpop.f32.mrf.mxu0
    %v902 = vadd.f32 %v733, %v901
    %v903 = vpop.f32.mrf.mxu0
    %v904 = vadd.f32 %v735, %v903
    %905 = vmatmul.bf16.gmra.mxu0 %v430
    %v906 = vpop.f32.mrf.mxu0
    %v907 = vadd.f32 %v738, %v906
    %v908 = vpop.f32.mrf.mxu0
    %v909 = vadd.f32 %v740, %v908
    %910 = vmatmul.bf16.gmra.mxu0 %v432
    %v911 = vpop.f32.mrf.mxu0
    %v912 = vadd.f32 %v743, %v911
    %v913 = vpop.f32.mrf.mxu0
    %v914 = vadd.f32 %v745, %v913
    %915 = vmatmul.bf16.gmra.mxu0 %v434
    %v916 = vpop.f32.mrf.mxu0
    %v917 = vadd.f32 %v748, %v916
    %v918 = vpop.f32.mrf.mxu0
    %v919 = vadd.f32 %v750, %v918
    %920 = vmatmul.bf16.gmra.mxu0 %v436
    %v921 = vpop.f32.mrf.mxu0
    %v922 = vadd.f32 %v753, %v921
    %v923 = vpop.f32.mrf.mxu0
    %v924 = vadd.f32 %v755, %v923
    %925 = vmatmul.bf16.gmra.mxu0 %v438
    %v926 = vpop.f32.mrf.mxu0
    %v927 = vadd.f32 %v758, %v926
    %v928 = vpop.f32.mrf.mxu0
    %v929 = vadd.f32 %v760, %v928
    %930 = vmatmul.bf16.gmra.mxu0 %v440
    %v931 = vpop.f32.mrf.mxu0
    %v932 = vadd.f32 %v763, %v931
    %v933 = vpop.f32.mrf.mxu0
    %v934 = vadd.f32 %v765, %v933
    %935 = vmatmul.bf16.gmra.mxu0 %v442
    %v936 = vpop.f32.mrf.mxu0
    %v937 = vadd.f32 %v768, %v936
    %v938 = vpop.f32.mrf.mxu0
    %v939 = vadd.f32 %v770, %v938
    %940 = vdwg.mxu0
    %v941 = vmax.f32 %v782, 0.0
    %v942 = vmax.f32 %v784, 0.0
    %v943 = vmax.f32 %v787, 0.0
    %v944 = vmax.f32 %v789, 0.0
    %v945 = vmax.f32 %v792, 0.0
    %v946 = vmax.f32 %v794, 0.0
    %v947 = vmax.f32 %v797, 0.0
    %v948 = vmax.f32 %v799, 0.0
    %v949 = vmax.f32 %v802, 0.0
    %v950 = vmax.f32 %v804, 0.0
    %v951 = vmax.f32 %v807, 0.0
    %v952 = vmax.f32 %v809, 0.0
    %v953 = vmax.f32 %v812, 0.0
    %v954 = vmax.f32 %v814, 0.0
    %v955 = vmax.f32 %v817, 0.0
    %v956 = vmax.f32 %v819, 0.0
    %v957 = vmax.f32 %v822, 0.0
    %v958 = vmax.f32 %v824, 0.0
    %v959 = vmax.f32 %v827, 0.0
    %v960 = vmax.f32 %v829, 0.0
    %v961 = vmax.f32 %v832, 0.0
    %v962 = vmax.f32 %v834, 0.0
    %v963 = vmax.f32 %v837, 0.0
    %v964 = vmax.f32 %v839, 0.0
    %v965 = vmax.f32 %v842, 0.0
    %v966 = vmax.f32 %v844, 0.0
    %v967 = vmax.f32 %v847, 0.0
    %v968 = vmax.f32 %v849, 0.0
    %v969 = vmax.f32 %v852, 0.0
    %v970 = vmax.f32 %v854, 0.0
    %v971 = vmax.f32 %v857, 0.0
    %v972 = vmax.f32 %v859, 0.0
    %v973 = vmax.f32 %v862, 0.0
    %v974 = vmax.f32 %v864, 0.0
    %v975 = vmax.f32 %v867, 0.0
    %v976 = vmax.f32 %v869, 0.0
    %v977 = vmax.f32 %v872, 0.0
    %v978 = vmax.f32 %v874, 0.0
    %v979 = vmax.f32 %v877, 0.0
    %v980 = vmax.f32 %v879, 0.0
    %v981 = vmax.f32 %v882, 0.0
    %v982 = vmax.f32 %v884, 0.0
    %v983 = vmax.f32 %v887, 0.0
    %v984 = vmax.f32 %v889, 0.0
    %v985 = vmax.f32 %v892, 0.0
    %v986 = vmax.f32 %v894, 0.0
    %v987 = vmax.f32 %v897, 0.0
    %v988 = vmax.f32 %v899, 0.0
    %v989 = vmax.f32 %v902, 0.0
    %v990 = vmax.f32 %v904, 0.0
    %v991 = vmax.f32 %v907, 0.0
    %v992 = vmax.f32 %v909, 0.0
    %v993 = vmax.f32 %v912, 0.0
    %v994 = vmax.f32 %v914, 0.0
    %v995 = vmax.f32 %v917, 0.0
    %v996 = vmax.f32 %v919, 0.0
    %v997 = vmax.f32 %v922, 0.0
    %v998 = vmax.f32 %v924, 0.0
    %v999 = vmax.f32 %v927, 0.0
    %v1000 = vmax.f32 %v929, 0.0
    %v1001 = vmax.f32 %v932, 0.0
    %v1002 = vmax.f32 %v934, 0.0
    %v1003 = vmax.f32 %v937, 0.0
    %v1004 = vmax.f32 %v939, 0.0
    %v1005 = vpack.c.bf16 %v942, %v941
    %v1006 = vpack.c.bf16 %v944, %v943
    %v1007 = vpack.c.bf16 %v946, %v945
    %v1008 = vpack.c.bf16 %v948, %v947
    %v1009 = vpack.c.bf16 %v950, %v949
    %v1010 = vpack.c.bf16 %v952, %v951
    %v1011 = vpack.c.bf16 %v954, %v953
    %v1012 = vpack.c.bf16 %v956, %v955
    %v1013 = vpack.c.bf16 %v958, %v957
    %v1014 = vpack.c.bf16 %v960, %v959
    %v1015 = vpack.c.bf16 %v962, %v961
    %v1016 = vpack.c.bf16 %v964, %v963
    %v1017 = vpack.c.bf16 %v966, %v965
    %v1018 = vpack.c.bf16 %v968, %v967
    %v1019 = vpack.c.bf16 %v970, %v969
    %v1020 = vpack.c.bf16 %v972, %v971
    %v1021 = vpack.c.bf16 %v974, %v973
    %v1022 = vpack.c.bf16 %v976, %v975
    %v1023 = vpack.c.bf16 %v978, %v977
    %v1024 = vpack.c.bf16 %v980, %v979
    %v1025 = vpack.c.bf16 %v982, %v981
    %v1026 = vpack.c.bf16 %v984, %v983
    %v1027 = vpack.c.bf16 %v986, %v985
    %v1028 = vpack.c.bf16 %v988, %v987
    %v1029 = vpack.c.bf16 %v990, %v989
    %v1030 = vpack.c.bf16 %v992, %v991
    %v1031 = vpack.c.bf16 %v994, %v993
    %v1032 = vpack.c.bf16 %v996, %v995
    %v1033 = vpack.c.bf16 %v998, %v997
    %v1034 = vpack.c.bf16 %v1000, %v999
    %v1035 = vpack.c.bf16 %v1002, %v1001
    %v1036 = vpack.c.bf16 %v1004, %v1003
    %v1037 = vld [vmem:[#allocation7] sm:$0xf]
    %v1038 = vld [vmem:[#allocation7 + $0x4] sm:$0xf]
    %v1039 = vld [vmem:[#allocation7 + $0x8] sm:$0xf]
    %v1040 = vld [vmem:[#allocation7 + $0xc] sm:$0xf]
    %v1041 = vld [vmem:[#allocation7 + $0x10] sm:$0xf]
    %v1042 = vld [vmem:[#allocation7 + $0x14] sm:$0xf]
    %v1043 = vld [vmem:[#allocation7 + $0x18] sm:$0xf]
    %v1044 = vld [vmem:[#allocation7 + $0x1c] sm:$0xf]
    %v1045 = vld [vmem:[#allocation7 + $0x20] sm:$0xf]
    %v1046 = vld [vmem:[#allocation7 + $0x24] sm:$0xf]
    %v1047 = vld [vmem:[#allocation7 + $0x28] sm:$0xf]
    %v1048 = vld [vmem:[#allocation7 + $0x2c] sm:$0xf]
    %v1049 = vld [vmem:[#allocation7 + $0x30] sm:$0xf]
    %v1050 = vld [vmem:[#allocation7 + $0x34] sm:$0xf]
    %v1051 = vld [vmem:[#allocation7 + $0x38] sm:$0xf]
    %v1052 = vld [vmem:[#allocation7 + $0x3c] sm:$0xf]
    %v1053 = vld [vmem:[%s4] sm:$0x1]
    %v1055 = vperm.slane %v1053, 0
    %v1073 = vunpack.c.l.b16 %v1037
    %v1074 = vunpack.c.l.b16 %v1038
    %v1075 = vunpack.c.l.b16 %v1039
    %v1076 = vunpack.c.l.b16 %v1040
    %v1077 = vunpack.c.l.b16 %v1041
    %v1078 = vunpack.c.l.b16 %v1042
    %v1079 = vunpack.c.l.b16 %v1043
    %v1080 = vunpack.c.l.b16 %v1044
    %v1081 = vunpack.c.l.b16 %v1045
    %v1082 = vunpack.c.l.b16 %v1046
    %v1083 = vunpack.c.l.b16 %v1047
    %v1084 = vunpack.c.l.b16 %v1048
    %v1085 = vunpack.c.l.b16 %v1049
    %v1086 = vunpack.c.l.b16 %v1050
    %v1087 = vunpack.c.l.b16 %v1051
    %v1088 = vunpack.c.l.b16 %v1052
    %v1089 = vpack.c.b16 %v1074, %v1073
    %v1090 = vpack.c.b16 %v1076, %v1075
    %v1091 = vpack.c.b16 %v1078, %v1077
    %v1092 = vpack.c.b16 %v1080, %v1079
    %v1093 = vpack.c.b16 %v1082, %v1081
    %v1094 = vpack.c.b16 %v1084, %v1083
    %v1095 = vpack.c.b16 %v1086, %v1085
    %v1096 = vpack.c.b16 %v1088, %v1087
    %1105 = vmatpush.bf16.msra.mxu0 %v1096
    %1106 = vmatpush.bf16.msra.mxu0 %v1095
    %1107 = vmatpush.bf16.msra.mxu0 %v1094
    %1108 = vmatpush.bf16.msra.mxu0 %v1093
    %1109 = vmatpush.bf16.msra.mxu0 %v1092
    %1110 = vmatpush.bf16.msra.mxu0 %v1091
    %1111 = vmatpush.bf16.msra.mxu0 %v1090
    %1112 = vmatpush.bf16.msra.mxu0 %v1089
    %1113 = vmatmul.bf16.gmra.mxu0 %v1005
    %v1114 = vpop.f32.mrf.mxu0
    %v1115 = vadd.f32 %v1055, %v1114
    %v1116 = vpop.f32.mrf.mxu0
    %v1117 = vadd.f32 %v1055, %v1116
    %1118 = vmatmul.bf16.gmra.mxu0 %v1006
    %v1119 = vpop.f32.mrf.mxu0
    %v1120 = vadd.f32 %v1055, %v1119
    %v1121 = vpop.f32.mrf.mxu0
    %v1122 = vadd.f32 %v1055, %v1121
    %1123 = vmatmul.bf16.gmra.mxu0 %v1007
    %v1124 = vpop.f32.mrf.mxu0
    %v1125 = vadd.f32 %v1055, %v1124
    %v1126 = vpop.f32.mrf.mxu0
    %v1127 = vadd.f32 %v1055, %v1126
    %1128 = vmatmul.bf16.gmra.mxu0 %v1008
    %v1129 = vpop.f32.mrf.mxu0
    %v1130 = vadd.f32 %v1055, %v1129
    %v1131 = vpop.f32.mrf.mxu0
    %v1132 = vadd.f32 %v1055, %v1131
    %1133 = vmatmul.bf16.gmra.mxu0 %v1009
    %v1134 = vpop.f32.mrf.mxu0
    %v1135 = vadd.f32 %v1055, %v1134
    %v1136 = vpop.f32.mrf.mxu0
    %v1137 = vadd.f32 %v1055, %v1136
    %1138 = vmatmul.bf16.gmra.mxu0 %v1010
    %v1139 = vpop.f32.mrf.mxu0
    %v1140 = vadd.f32 %v1055, %v1139
    %v1141 = vpop.f32.mrf.mxu0
    %v1142 = vadd.f32 %v1055, %v1141
    %1143 = vmatmul.bf16.gmra.mxu0 %v1011
    %v1144 = vpop.f32.mrf.mxu0
    %v1145 = vadd.f32 %v1055, %v1144
    %v1146 = vpop.f32.mrf.mxu0
    %v1147 = vadd.f32 %v1055, %v1146
    %1148 = vmatmul.bf16.gmra.mxu0 %v1012
    %v1149 = vpop.f32.mrf.mxu0
    %v1150 = vadd.f32 %v1055, %v1149
    %v1151 = vpop.f32.mrf.mxu0
    %v1152 = vadd.f32 %v1055, %v1151
    %1153 = vmatmul.bf16.gmra.mxu0 %v1013
    %v1154 = vpop.f32.mrf.mxu0
    %v1155 = vadd.f32 %v1055, %v1154
    %v1156 = vpop.f32.mrf.mxu0
    %v1157 = vadd.f32 %v1055, %v1156
    %1158 = vmatmul.bf16.gmra.mxu0 %v1014
    %v1159 = vpop.f32.mrf.mxu0
    %v1160 = vadd.f32 %v1055, %v1159
    %v1161 = vpop.f32.mrf.mxu0
    %v1162 = vadd.f32 %v1055, %v1161
    %1163 = vmatmul.bf16.gmra.mxu0 %v1015
    %v1164 = vpop.f32.mrf.mxu0
    %v1165 = vadd.f32 %v1055, %v1164
    %v1166 = vpop.f32.mrf.mxu0
    %v1167 = vadd.f32 %v1055, %v1166
    %1168 = vmatmul.bf16.gmra.mxu0 %v1016
    %v1169 = vpop.f32.mrf.mxu0
    %v1170 = vadd.f32 %v1055, %v1169
    %v1171 = vpop.f32.mrf.mxu0
    %v1172 = vadd.f32 %v1055, %v1171
    %1173 = vmatmul.bf16.gmra.mxu0 %v1017
    %v1174 = vpop.f32.mrf.mxu0
    %v1175 = vadd.f32 %v1055, %v1174
    %v1176 = vpop.f32.mrf.mxu0
    %v1177 = vadd.f32 %v1055, %v1176
    %1178 = vmatmul.bf16.gmra.mxu0 %v1018
    %v1179 = vpop.f32.mrf.mxu0
    %v1180 = vadd.f32 %v1055, %v1179
    %v1181 = vpop.f32.mrf.mxu0
    %v1182 = vadd.f32 %v1055, %v1181
    %1183 = vmatmul.bf16.gmra.mxu0 %v1019
    %v1184 = vpop.f32.mrf.mxu0
    %v1185 = vadd.f32 %v1055, %v1184
    %v1186 = vpop.f32.mrf.mxu0
    %v1187 = vadd.f32 %v1055, %v1186
    %1188 = vmatmul.bf16.gmra.mxu0 %v1020
    %v1189 = vpop.f32.mrf.mxu0
    %v1190 = vadd.f32 %v1055, %v1189
    %v1191 = vpop.f32.mrf.mxu0
    %v1192 = vadd.f32 %v1055, %v1191
    %1193 = vmatmul.bf16.gmra.mxu0 %v1021
    %v1194 = vpop.f32.mrf.mxu0
    %v1195 = vadd.f32 %v1055, %v1194
    %v1196 = vpop.f32.mrf.mxu0
    %v1197 = vadd.f32 %v1055, %v1196
    %1198 = vmatmul.bf16.gmra.mxu0 %v1022
    %v1199 = vpop.f32.mrf.mxu0
    %v1200 = vadd.f32 %v1055, %v1199
    %v1201 = vpop.f32.mrf.mxu0
    %v1202 = vadd.f32 %v1055, %v1201
    %1203 = vmatmul.bf16.gmra.mxu0 %v1023
    %v1204 = vpop.f32.mrf.mxu0
    %v1205 = vadd.f32 %v1055, %v1204
    %v1206 = vpop.f32.mrf.mxu0
    %v1207 = vadd.f32 %v1055, %v1206
    %1208 = vmatmul.bf16.gmra.mxu0 %v1024
    %v1209 = vpop.f32.mrf.mxu0
    %v1210 = vadd.f32 %v1055, %v1209
    %v1211 = vpop.f32.mrf.mxu0
    %v1212 = vadd.f32 %v1055, %v1211
    %1213 = vmatmul.bf16.gmra.mxu0 %v1025
    %v1214 = vpop.f32.mrf.mxu0
    %v1215 = vadd.f32 %v1055, %v1214
    %v1216 = vpop.f32.mrf.mxu0
    %v1217 = vadd.f32 %v1055, %v1216
    %1218 = vmatmul.bf16.gmra.mxu0 %v1026
    %v1219 = vpop.f32.mrf.mxu0
    %v1220 = vadd.f32 %v1055, %v1219
    %v1221 = vpop.f32.mrf.mxu0
    %v1222 = vadd.f32 %v1055, %v1221
    %1223 = vmatmul.bf16.gmra.mxu0 %v1027
    %v1224 = vpop.f32.mrf.mxu0
    %v1225 = vadd.f32 %v1055, %v1224
    %v1226 = vpop.f32.mrf.mxu0
    %v1227 = vadd.f32 %v1055, %v1226
    %1228 = vmatmul.bf16.gmra.mxu0 %v1028
    %v1229 = vpop.f32.mrf.mxu0
    %v1230 = vadd.f32 %v1055, %v1229
    %v1231 = vpop.f32.mrf.mxu0
    %v1232 = vadd.f32 %v1055, %v1231
    %1233 = vmatmul.bf16.gmra.mxu0 %v1029
    %v1234 = vpop.f32.mrf.mxu0
    %v1235 = vadd.f32 %v1055, %v1234
    %v1236 = vpop.f32.mrf.mxu0
    %v1237 = vadd.f32 %v1055, %v1236
    %1238 = vmatmul.bf16.gmra.mxu0 %v1030
    %v1239 = vpop.f32.mrf.mxu0
    %v1240 = vadd.f32 %v1055, %v1239
    %v1241 = vpop.f32.mrf.mxu0
    %v1242 = vadd.f32 %v1055, %v1241
    %1243 = vmatmul.bf16.gmra.mxu0 %v1031
    %v1244 = vpop.f32.mrf.mxu0
    %v1245 = vadd.f32 %v1055, %v1244
    %v1246 = vpop.f32.mrf.mxu0
    %v1247 = vadd.f32 %v1055, %v1246
    %1248 = vmatmul.bf16.gmra.mxu0 %v1032
    %v1249 = vpop.f32.mrf.mxu0
    %v1250 = vadd.f32 %v1055, %v1249
    %v1251 = vpop.f32.mrf.mxu0
    %v1252 = vadd.f32 %v1055, %v1251
    %1253 = vmatmul.bf16.gmra.mxu0 %v1033
    %v1254 = vpop.f32.mrf.mxu0
    %v1255 = vadd.f32 %v1055, %v1254
    %v1256 = vpop.f32.mrf.mxu0
    %v1257 = vadd.f32 %v1055, %v1256
    %1258 = vmatmul.bf16.gmra.mxu0 %v1034
    %v1259 = vpop.f32.mrf.mxu0
    %v1260 = vadd.f32 %v1055, %v1259
    %v1261 = vpop.f32.mrf.mxu0
    %v1262 = vadd.f32 %v1055, %v1261
    %1263 = vmatmul.bf16.gmra.mxu0 %v1035
    %v1264 = vpop.f32.mrf.mxu0
    %v1265 = vadd.f32 %v1055, %v1264
    %v1266 = vpop.f32.mrf.mxu0
    %v1267 = vadd.f32 %v1055, %v1266
    %1268 = vmatmul.bf16.gmra.mxu0 %v1036
    %v1269 = vpop.f32.mrf.mxu0
    %v1270 = vadd.f32 %v1055, %v1269
    %v1271 = vpop.f32.mrf.mxu0
    %v1272 = vadd.f32 %v1055, %v1271
    %1273 = vdwg.mxu0
    %v1274 = vmax.f32 %v1115, 0.0
    %v1275 = vmax.f32 %v1117, 0.0
    %v1276 = vmax.f32 %v1120, 0.0
    %v1277 = vmax.f32 %v1122, 0.0
    %v1278 = vmax.f32 %v1125, 0.0
    %v1279 = vmax.f32 %v1127, 0.0
    %v1280 = vmax.f32 %v1130, 0.0
    %v1281 = vmax.f32 %v1132, 0.0
    %v1282 = vmax.f32 %v1135, 0.0
    %v1283 = vmax.f32 %v1137, 0.0
    %v1284 = vmax.f32 %v1140, 0.0
    %v1285 = vmax.f32 %v1142, 0.0
    %v1286 = vmax.f32 %v1145, 0.0
    %v1287 = vmax.f32 %v1147, 0.0
    %v1288 = vmax.f32 %v1150, 0.0
    %v1289 = vmax.f32 %v1152, 0.0
    %v1290 = vmax.f32 %v1155, 0.0
    %v1291 = vmax.f32 %v1157, 0.0
    %v1292 = vmax.f32 %v1160, 0.0
    %v1293 = vmax.f32 %v1162, 0.0
    %v1294 = vmax.f32 %v1165, 0.0
    %v1295 = vmax.f32 %v1167, 0.0
    %v1296 = vmax.f32 %v1170, 0.0
    %v1297 = vmax.f32 %v1172, 0.0
    %v1298 = vmax.f32 %v1175, 0.0
    %v1299 = vmax.f32 %v1177, 0.0
    %v1300 = vmax.f32 %v1180, 0.0
    %v1301 = vmax.f32 %v1182, 0.0
    %v1302 = vmax.f32 %v1185, 0.0
    %v1303 = vmax.f32 %v1187, 0.0
    %v1304 = vmax.f32 %v1190, 0.0
    %v1305 = vmax.f32 %v1192, 0.0
    %v1306 = vmax.f32 %v1195, 0.0
    %v1307 = vmax.f32 %v1197, 0.0
    %v1308 = vmax.f32 %v1200, 0.0
    %v1309 = vmax.f32 %v1202, 0.0
    %v1310 = vmax.f32 %v1205, 0.0
    %v1311 = vmax.f32 %v1207, 0.0
    %v1312 = vmax.f32 %v1210, 0.0
    %v1313 = vmax.f32 %v1212, 0.0
    %v1314 = vmax.f32 %v1215, 0.0
    %v1315 = vmax.f32 %v1217, 0.0
    %v1316 = vmax.f32 %v1220, 0.0
    %v1317 = vmax.f32 %v1222, 0.0
    %v1318 = vmax.f32 %v1225, 0.0
    %v1319 = vmax.f32 %v1227, 0.0
    %v1320 = vmax.f32 %v1230, 0.0
    %v1321 = vmax.f32 %v1232, 0.0
    %v1322 = vmax.f32 %v1235, 0.0
    %v1323 = vmax.f32 %v1237, 0.0
    %v1324 = vmax.f32 %v1240, 0.0
    %v1325 = vmax.f32 %v1242, 0.0
    %v1326 = vmax.f32 %v1245, 0.0
    %v1327 = vmax.f32 %v1247, 0.0
    %v1328 = vmax.f32 %v1250, 0.0
    %v1329 = vmax.f32 %v1252, 0.0
    %v1330 = vmax.f32 %v1255, 0.0
    %v1331 = vmax.f32 %v1257, 0.0
    %v1332 = vmax.f32 %v1260, 0.0
    %v1333 = vmax.f32 %v1262, 0.0
    %v1334 = vmax.f32 %v1265, 0.0
    %v1335 = vmax.f32 %v1267, 0.0
    %v1336 = vmax.f32 %v1270, 0.0
    %v1337 = vmax.f32 %v1272, 0.0
    %v1338 = vpack.c.bf16 %v1275, %v1274
    %v1339 = vpack.c.bf16 %v1277, %v1276
    %v1340 = vpack.c.bf16 %v1279, %v1278
    %v1341 = vpack.c.bf16 %v1281, %v1280
    %v1342 = vpack.c.bf16 %v1283, %v1282
    %v1343 = vpack.c.bf16 %v1285, %v1284
    %v1344 = vpack.c.bf16 %v1287, %v1286
    %v1345 = vpack.c.bf16 %v1289, %v1288
    %v1346 = vpack.c.bf16 %v1291, %v1290
    %v1347 = vpack.c.bf16 %v1293, %v1292
    %v1348 = vpack.c.bf16 %v1295, %v1294
    %v1349 = vpack.c.bf16 %v1297, %v1296
    %v1350 = vpack.c.bf16 %v1299, %v1298
    %v1351 = vpack.c.bf16 %v1301, %v1300
    %v1352 = vpack.c.bf16 %v1303, %v1302
    %v1353 = vpack.c.bf16 %v1305, %v1304
    %v1354 = vpack.c.bf16 %v1307, %v1306
    %v1355 = vpack.c.bf16 %v1309, %v1308
    %v1356 = vpack.c.bf16 %v1311, %v1310
    %v1357 = vpack.c.bf16 %v1313, %v1312
    %v1358 = vpack.c.bf16 %v1315, %v1314
    %v1359 = vpack.c.bf16 %v1317, %v1316
    %v1360 = vpack.c.bf16 %v1319, %v1318
    %v1361 = vpack.c.bf16 %v1321, %v1320
    %v1362 = vpack.c.bf16 %v1323, %v1322
    %v1363 = vpack.c.bf16 %v1325, %v1324
    %v1364 = vpack.c.bf16 %v1327, %v1326
    %v1365 = vpack.c.bf16 %v1329, %v1328
    %v1366 = vpack.c.bf16 %v1331, %v1330
    %v1367 = vpack.c.bf16 %v1333, %v1332
    %v1368 = vpack.c.bf16 %v1335, %v1334
    %v1369 = vpack.c.bf16 %v1337, %v1336
    %v1370 = vld [vmem:[#allocation8] sm:$0xf]
    %v1371 = vld [vmem:[#allocation8 + $0x4] sm:$0xf]
    %v1372 = vld [vmem:[#allocation8 + $0x8] sm:$0xf]
    %v1373 = vld [vmem:[#allocation8 + $0xc] sm:$0xf]
    %v1374 = vld [vmem:[#allocation8 + $0x10] sm:$0xf]
    %v1375 = vld [vmem:[#allocation8 + $0x14] sm:$0xf]
    %v1376 = vld [vmem:[#allocation8 + $0x18] sm:$0xf]
    %v1377 = vld [vmem:[#allocation8 + $0x1c] sm:$0xf]
    %v1378 = vld [vmem:[#allocation8 + $0x20] sm:$0xf]
    %v1379 = vld [vmem:[#allocation8 + $0x24] sm:$0xf]
    %v1380 = vld [vmem:[#allocation8 + $0x28] sm:$0xf]
    %v1381 = vld [vmem:[#allocation8 + $0x2c] sm:$0xf]
    %v1382 = vld [vmem:[#allocation8 + $0x30] sm:$0xf]
    %v1383 = vld [vmem:[#allocation8 + $0x34] sm:$0xf]
    %v1384 = vld [vmem:[#allocation8 + $0x38] sm:$0xf]
    %v1385 = vld [vmem:[#allocation8 + $0x3c] sm:$0xf]
    %v1402 = vunpack.c.l.b16 %v1370
    %v1403 = vunpack.c.l.b16 %v1371
    %v1404 = vunpack.c.l.b16 %v1372
    %v1405 = vunpack.c.l.b16 %v1373
    %v1406 = vunpack.c.l.b16 %v1374
    %v1407 = vunpack.c.l.b16 %v1375
    %v1408 = vunpack.c.l.b16 %v1376
    %v1409 = vunpack.c.l.b16 %v1377
    %v1410 = vunpack.c.l.b16 %v1378
    %v1411 = vunpack.c.l.b16 %v1379
    %v1412 = vunpack.c.l.b16 %v1380
    %v1413 = vunpack.c.l.b16 %v1381
    %v1414 = vunpack.c.l.b16 %v1382
    %v1415 = vunpack.c.l.b16 %v1383
    %v1416 = vunpack.c.l.b16 %v1384
    %v1417 = vunpack.c.l.b16 %v1385
    %v1418 = vpack.c.b16 %v1403, %v1402
    %v1419 = vpack.c.b16 %v1405, %v1404
    %v1420 = vpack.c.b16 %v1407, %v1406
    %v1421 = vpack.c.b16 %v1409, %v1408
    %v1422 = vpack.c.b16 %v1411, %v1410
    %v1423 = vpack.c.b16 %v1413, %v1412
    %v1424 = vpack.c.b16 %v1415, %v1414
    %v1425 = vpack.c.b16 %v1417, %v1416
    %1434 = vmatpush.bf16.msra.mxu0 %v1425
    %1435 = vmatpush.bf16.msra.mxu0 %v1424
    %1436 = vmatpush.bf16.msra.mxu0 %v1423
    %1437 = vmatpush.bf16.msra.mxu0 %v1422
    %1438 = vmatpush.bf16.msra.mxu0 %v1421
    %1439 = vmatpush.bf16.msra.mxu0 %v1420
    %1440 = vmatpush.bf16.msra.mxu0 %v1419
    %1441 = vmatpush.bf16.msra.mxu0 %v1418
    %1442 = vmatmul.bf16.gmra.mxu0 %v1338
    %v1443 = vpop.f32.mrf.mxu0
    %v1444 = vadd.f32 0.0, %v1443
    %v1445 = vpop.f32.mrf.mxu0
    %v1446 = vadd.f32 0.0, %v1445
    %1447 = vmatmul.bf16.gmra.mxu0 %v1339
    %v1448 = vpop.f32.mrf.mxu0
    %v1449 = vadd.f32 0.0, %v1448
    %v1450 = vpop.f32.mrf.mxu0
    %v1451 = vadd.f32 0.0, %v1450
    %1452 = vmatmul.bf16.gmra.mxu0 %v1340
    %v1453 = vpop.f32.mrf.mxu0
    %v1454 = vadd.f32 0.0, %v1453
    %v1455 = vpop.f32.mrf.mxu0
    %v1456 = vadd.f32 0.0, %v1455
    %1457 = vmatmul.bf16.gmra.mxu0 %v1341
    %v1458 = vpop.f32.mrf.mxu0
    %v1459 = vadd.f32 0.0, %v1458
    %v1460 = vpop.f32.mrf.mxu0
    %v1461 = vadd.f32 0.0, %v1460
    %1462 = vmatmul.bf16.gmra.mxu0 %v1342
    %v1463 = vpop.f32.mrf.mxu0
    %v1464 = vadd.f32 0.0, %v1463
    %v1465 = vpop.f32.mrf.mxu0
    %v1466 = vadd.f32 0.0, %v1465
    %1467 = vmatmul.bf16.gmra.mxu0 %v1343
    %v1468 = vpop.f32.mrf.mxu0
    %v1469 = vadd.f32 0.0, %v1468
    %v1470 = vpop.f32.mrf.mxu0
    %v1471 = vadd.f32 0.0, %v1470
    %1472 = vmatmul.bf16.gmra.mxu0 %v1344
    %v1473 = vpop.f32.mrf.mxu0
    %v1474 = vadd.f32 0.0, %v1473
    %v1475 = vpop.f32.mrf.mxu0
    %v1476 = vadd.f32 0.0, %v1475
    %1477 = vmatmul.bf16.gmra.mxu0 %v1345
    %v1478 = vpop.f32.mrf.mxu0
    %v1479 = vadd.f32 0.0, %v1478
    %v1480 = vpop.f32.mrf.mxu0
    %v1481 = vadd.f32 0.0, %v1480
    %1482 = vmatmul.bf16.gmra.mxu0 %v1346
    %v1483 = vpop.f32.mrf.mxu0
    %v1484 = vadd.f32 0.0, %v1483
    %v1485 = vpop.f32.mrf.mxu0
    %v1486 = vadd.f32 0.0, %v1485
    %1487 = vmatmul.bf16.gmra.mxu0 %v1347
    %v1488 = vpop.f32.mrf.mxu0
    %v1489 = vadd.f32 0.0, %v1488
    %v1490 = vpop.f32.mrf.mxu0
    %v1491 = vadd.f32 0.0, %v1490
    %1492 = vmatmul.bf16.gmra.mxu0 %v1348
    %v1493 = vpop.f32.mrf.mxu0
    %v1494 = vadd.f32 0.0, %v1493
    %v1495 = vpop.f32.mrf.mxu0
    %v1496 = vadd.f32 0.0, %v1495
    %1497 = vmatmul.bf16.gmra.mxu0 %v1349
    %v1498 = vpop.f32.mrf.mxu0
    %v1499 = vadd.f32 0.0, %v1498
    %v1500 = vpop.f32.mrf.mxu0
    %v1501 = vadd.f32 0.0, %v1500
    %1502 = vmatmul.bf16.gmra.mxu0 %v1350
    %v1503 = vpop.f32.mrf.mxu0
    %v1504 = vadd.f32 0.0, %v1503
    %v1505 = vpop.f32.mrf.mxu0
    %v1506 = vadd.f32 0.0, %v1505
    %1507 = vmatmul.bf16.gmra.mxu0 %v1351
    %v1508 = vpop.f32.mrf.mxu0
    %v1509 = vadd.f32 0.0, %v1508
    %v1510 = vpop.f32.mrf.mxu0
    %v1511 = vadd.f32 0.0, %v1510
    %1512 = vmatmul.bf16.gmra.mxu0 %v1352
    %v1513 = vpop.f32.mrf.mxu0
    %v1514 = vadd.f32 0.0, %v1513
    %v1515 = vpop.f32.mrf.mxu0
    %v1516 = vadd.f32 0.0, %v1515
    %1517 = vmatmul.bf16.gmra.mxu0 %v1353
    %v1518 = vpop.f32.mrf.mxu0
    %v1519 = vadd.f32 0.0, %v1518
    %v1520 = vpop.f32.mrf.mxu0
    %v1521 = vadd.f32 0.0, %v1520
    %1522 = vmatmul.bf16.gmra.mxu0 %v1354
    %v1523 = vpop.f32.mrf.mxu0
    %v1524 = vadd.f32 0.0, %v1523
    %v1525 = vpop.f32.mrf.mxu0
    %v1526 = vadd.f32 0.0, %v1525
    %1527 = vmatmul.bf16.gmra.mxu0 %v1355
    %v1528 = vpop.f32.mrf.mxu0
    %v1529 = vadd.f32 0.0, %v1528
    %v1530 = vpop.f32.mrf.mxu0
    %v1531 = vadd.f32 0.0, %v1530
    %1532 = vmatmul.bf16.gmra.mxu0 %v1356
    %v1533 = vpop.f32.mrf.mxu0
    %v1534 = vadd.f32 0.0, %v1533
    %v1535 = vpop.f32.mrf.mxu0
    %v1536 = vadd.f32 0.0, %v1535
    %1537 = vmatmul.bf16.gmra.mxu0 %v1357
    %v1538 = vpop.f32.mrf.mxu0
    %v1539 = vadd.f32 0.0, %v1538
    %v1540 = vpop.f32.mrf.mxu0
    %v1541 = vadd.f32 0.0, %v1540
    %1542 = vmatmul.bf16.gmra.mxu0 %v1358
    %v1543 = vpop.f32.mrf.mxu0
    %v1544 = vadd.f32 0.0, %v1543
    %v1545 = vpop.f32.mrf.mxu0
    %v1546 = vadd.f32 0.0, %v1545
    %1547 = vmatmul.bf16.gmra.mxu0 %v1359
    %v1548 = vpop.f32.mrf.mxu0
    %v1549 = vadd.f32 0.0, %v1548
    %v1550 = vpop.f32.mrf.mxu0
    %v1551 = vadd.f32 0.0, %v1550
    %1552 = vmatmul.bf16.gmra.mxu0 %v1360
    %v1553 = vpop.f32.mrf.mxu0
    %v1554 = vadd.f32 0.0, %v1553
    %v1555 = vpop.f32.mrf.mxu0
    %v1556 = vadd.f32 0.0, %v1555
    %1557 = vmatmul.bf16.gmra.mxu0 %v1361
    %v1558 = vpop.f32.mrf.mxu0
    %v1559 = vadd.f32 0.0, %v1558
    %v1560 = vpop.f32.mrf.mxu0
    %v1561 = vadd.f32 0.0, %v1560
    %1562 = vmatmul.bf16.gmra.mxu0 %v1362
    %v1563 = vpop.f32.mrf.mxu0
    %v1564 = vadd.f32 0.0, %v1563
    %v1565 = vpop.f32.mrf.mxu0
    %v1566 = vadd.f32 0.0, %v1565
    %1567 = vmatmul.bf16.gmra.mxu0 %v1363
    %v1568 = vpop.f32.mrf.mxu0
    %v1569 = vadd.f32 0.0, %v1568
    %v1570 = vpop.f32.mrf.mxu0
    %v1571 = vadd.f32 0.0, %v1570
    %1572 = vmatmul.bf16.gmra.mxu0 %v1364
    %v1573 = vpop.f32.mrf.mxu0
    %v1574 = vadd.f32 0.0, %v1573
    %v1575 = vpop.f32.mrf.mxu0
    %v1576 = vadd.f32 0.0, %v1575
    %1577 = vmatmul.bf16.gmra.mxu0 %v1365
    %v1578 = vpop.f32.mrf.mxu0
    %v1579 = vadd.f32 0.0, %v1578
    %v1580 = vpop.f32.mrf.mxu0
    %v1581 = vadd.f32 0.0, %v1580
    %1582 = vmatmul.bf16.gmra.mxu0 %v1366
    %v1583 = vpop.f32.mrf.mxu0
    %v1584 = vadd.f32 0.0, %v1583
    %v1585 = vpop.f32.mrf.mxu0
    %v1586 = vadd.f32 0.0, %v1585
    %1587 = vmatmul.bf16.gmra.mxu0 %v1367
    %v1588 = vpop.f32.mrf.mxu0
    %v1589 = vadd.f32 0.0, %v1588
    %v1590 = vpop.f32.mrf.mxu0
    %v1591 = vadd.f32 0.0, %v1590
    %1592 = vmatmul.bf16.gmra.mxu0 %v1368
    %v1593 = vpop.f32.mrf.mxu0
    %v1594 = vadd.f32 0.0, %v1593
    %v1595 = vpop.f32.mrf.mxu0
    %v1596 = vadd.f32 0.0, %v1595
    %1597 = vmatmul.bf16.gmra.mxu0 %v1369
    %v1598 = vpop.f32.mrf.mxu0
    %v1599 = vadd.f32 0.0, %v1598
    %v1600 = vpop.f32.mrf.mxu0
    %v1601 = vadd.f32 0.0, %v1600
    %1602 = vdwg.mxu0
    %v1603 = vtanh.pop %v1444
    %v1604 = vtanh.pop %v1446
    %v1605 = vtanh.pop %v1449
    %v1606 = vtanh.pop %v1451
    %v1607 = vtanh.pop %v1454
    %v1608 = vtanh.pop %v1456
    %v1609 = vtanh.pop %v1459
    %v1610 = vtanh.pop %v1461
    %v1611 = vtanh.pop %v1464
    %v1612 = vtanh.pop %v1466
    %v1613 = vtanh.pop %v1469
    %v1614 = vtanh.pop %v1471
    %v1615 = vtanh.pop %v1474
    %v1616 = vtanh.pop %v1476
    %v1617 = vtanh.pop %v1479
    %v1618 = vtanh.pop %v1481
    %v1619 = vtanh.pop %v1484
    %v1620 = vtanh.pop %v1486
    %v1621 = vtanh.pop %v1489
    %v1622 = vtanh.pop %v1491
    %v1623 = vtanh.pop %v1494
    %v1624 = vtanh.pop %v1496
    %v1625 = vtanh.pop %v1499
    %v1626 = vtanh.pop %v1501
    %v1627 = vtanh.pop %v1504
    %v1628 = vtanh.pop %v1506
    %v1629 = vtanh.pop %v1509
    %v1630 = vtanh.pop %v1511
    %v1631 = vtanh.pop %v1514
    %v1632 = vtanh.pop %v1516
    %v1633 = vtanh.pop %v1519
    %v1634 = vtanh.pop %v1521
    %v1635 = vtanh.pop %v1524
    %v1636 = vtanh.pop %v1526
    %v1637 = vtanh.pop %v1529
    %v1638 = vtanh.pop %v1531
    %v1639 = vtanh.pop %v1534
    %v1640 = vtanh.pop %v1536
    %v1641 = vtanh.pop %v1539
    %v1642 = vtanh.pop %v1541
    %v1643 = vtanh.pop %v1544
    %v1644 = vtanh.pop %v1546
    %v1645 = vtanh.pop %v1549
    %v1646 = vtanh.pop %v1551
    %v1647 = vtanh.pop %v1554
    %v1648 = vtanh.pop %v1556
    %v1649 = vtanh.pop %v1559
    %v1650 = vtanh.pop %v1561
    %v1651 = vtanh.pop %v1564
    %v1652 = vtanh.pop %v1566
    %v1653 = vtanh.pop %v1569
    %v1654 = vtanh.pop %v1571
    %v1655 = vtanh.pop %v1574
    %v1656 = vtanh.pop %v1576
    %v1657 = vtanh.pop %v1579
    %v1658 = vtanh.pop %v1581
    %v1659 = vtanh.pop %v1584
    %v1660 = vtanh.pop %v1586
    %v1661 = vtanh.pop %v1589
    %v1662 = vtanh.pop %v1591
    %v1663 = vtanh.pop %v1594
    %v1664 = vtanh.pop %v1596
    %v1665 = vtanh.pop %v1599
    %v1666 = vtanh.pop %v1601
    %1667 = vst [vmem:[#allocation10] sm:$0xff] %v1603
    %1668 = vst [vmem:[#allocation10 + $0x8] sm:$0xff] %v1604
    %1669 = vst [vmem:[#allocation10 + $0x10] sm:$0xff] %v1605
    %1670 = vst [vmem:[#allocation10 + $0x18] sm:$0xff] %v1606
    %1671 = vst [vmem:[#allocation10 + $0x20] sm:$0xff] %v1607
    %1672 = vst [vmem:[#allocation10 + $0x28] sm:$0xff] %v1608
    %1673 = vst [vmem:[#allocation10 + $0x30] sm:$0xff] %v1609
    %1674 = vst [vmem:[#allocation10 + $0x38] sm:$0xff] %v1610
    %1675 = vst [vmem:[#allocation10 + $0x40] sm:$0xff] %v1611
    %1676 = vst [vmem:[#allocation10 + $0x48] sm:$0xff] %v1612
    %1677 = vst [vmem:[#allocation10 + $0x50] sm:$0xff] %v1613
    %1678 = vst [vmem:[#allocation10 + $0x58] sm:$0xff] %v1614
    %1679 = vst [vmem:[#allocation10 + $0x60] sm:$0xff] %v1615
    %1680 = vst [vmem:[#allocation10 + $0x68] sm:$0xff] %v1616
    %1681 = vst [vmem:[#allocation10 + $0x70] sm:$0xff] %v1617
    %1682 = vst [vmem:[#allocation10 + $0x78] sm:$0xff] %v1618
    %1683 = vst [vmem:[#allocation10 + $0x80] sm:$0xff] %v1619
    %1684 = vst [vmem:[#allocation10 + $0x88] sm:$0xff] %v1620
    %1685 = vst [vmem:[#allocation10 + $0x90] sm:$0xff] %v1621
    %1686 = vst [vmem:[#allocation10 + $0x98] sm:$0xff] %v1622
    %1687 = vst [vmem:[#allocation10 + $0xa0] sm:$0xff] %v1623
    %1688 = vst [vmem:[#allocation10 + $0xa8] sm:$0xff] %v1624
    %1689 = vst [vmem:[#allocation10 + $0xb0] sm:$0xff] %v1625
    %1690 = vst [vmem:[#allocation10 + $0xb8] sm:$0xff] %v1626
    %1691 = vst [vmem:[#allocation10 + $0xc0] sm:$0xff] %v1627
    %1692 = vst [vmem:[#allocation10 + $0xc8] sm:$0xff] %v1628
    %1693 = vst [vmem:[#allocation10 + $0xd0] sm:$0xff] %v1629
    %1694 = vst [vmem:[#allocation10 + $0xd8] sm:$0xff] %v1630
    %1695 = vst [vmem:[#allocation10 + $0xe0] sm:$0xff] %v1631
    %1696 = vst [vmem:[#allocation10 + $0xe8] sm:$0xff] %v1632
    %1697 = vst [vmem:[#allocation10 + $0xf0] sm:$0xff] %v1633
    %1698 = vst [vmem:[#allocation10 + $0xf8] sm:$0xff] %v1634
    %1699 = vst [vmem:[#allocation10 + $0x100] sm:$0xff] %v1635
    %1700 = vst [vmem:[#allocation10 + $0x108] sm:$0xff] %v1636
    %1701 = vst [vmem:[#allocation10 + $0x110] sm:$0xff] %v1637
    %1702 = vst [vmem:[#allocation10 + $0x118] sm:$0xff] %v1638
    %1703 = vst [vmem:[#allocation10 + $0x120] sm:$0xff] %v1639
    %1704 = vst [vmem:[#allocation10 + $0x128] sm:$0xff] %v1640
    %1705 = vst [vmem:[#allocation10 + $0x130] sm:$0xff] %v1641
    %1706 = vst [vmem:[#allocation10 + $0x138] sm:$0xff] %v1642
    %1707 = vst [vmem:[#allocation10 + $0x140] sm:$0xff] %v1643
    %1708 = vst [vmem:[#allocation10 + $0x148] sm:$0xff] %v1644
    %1709 = vst [vmem:[#allocation10 + $0x150] sm:$0xff] %v1645
    %1710 = vst [vmem:[#allocation10 + $0x158] sm:$0xff] %v1646
    %1711 = vst [vmem:[#allocation10 + $0x160] sm:$0xff] %v1647
    %1712 = vst [vmem:[#allocation10 + $0x168] sm:$0xff] %v1648
    %1713 = vst [vmem:[#allocation10 + $0x170] sm:$0xff] %v1649
    %1714 = vst [vmem:[#allocation10 + $0x178] sm:$0xff] %v1650
    %1715 = vst [vmem:[#allocation10 + $0x180] sm:$0xff] %v1651
    %1716 = vst [vmem:[#allocation10 + $0x188] sm:$0xff] %v1652
    %1717 = vst [vmem:[#allocation10 + $0x190] sm:$0xff] %v1653
    %1718 = vst [vmem:[#allocation10 + $0x198] sm:$0xff] %v1654
    %1719 = vst [vmem:[#allocation10 + $0x1a0] sm:$0xff] %v1655
    %1720 = vst [vmem:[#allocation10 + $0x1a8] sm:$0xff] %v1656
    %1721 = vst [vmem:[#allocation10 + $0x1b0] sm:$0xff] %v1657
    %1722 = vst [vmem:[#allocation10 + $0x1b8] sm:$0xff] %v1658
    %1723 = vst [vmem:[#allocation10 + $0x1c0] sm:$0xff] %v1659
    %1724 = vst [vmem:[#allocation10 + $0x1c8] sm:$0xff] %v1660
    %1725 = vst [vmem:[#allocation10 + $0x1d0] sm:$0xff] %v1661
    %1726 = vst [vmem:[#allocation10 + $0x1d8] sm:$0xff] %v1662
    %1727 = vst [vmem:[#allocation10 + $0x1e0] sm:$0xff] %v1663
    %1728 = vst [vmem:[#allocation10 + $0x1e8] sm:$0xff] %v1664
    %1729 = vst [vmem:[#allocation10 + $0x1f0] sm:$0xff] %v1665
    %1730 = vst [vmem:[#allocation10 + $0x1f8] sm:$0xff] %v1666
    // Predicated region
    $region42: #{tpu_custom_call.1} parent=1 // pred_check
      _
    $region43: #{tpu_custom_call.1} parent=1 // pred_check_branch
      %1732 = sbr.rel (0) target = $region45
    $region44: #{tpu_custom_call.1} parent=1 // pred_region
      %1734 = vsyncadd [#allocation4], 0
      %s1735 = sshll.u32 [#allocation10], 4
      %s1736 = int_to_ptr.vmem [resolvable:$true] %s1735
      %s1737 = sshll.u32 %s6, 4
      %s1738 = int_to_ptr.hbm [resolvable:$true] %s1737
      %1743 = dma.vmem_to_hbm [thread:$0]  %s1736, 8192, %s1738, [#allocation4], 128, 128, 8
    $region45: #{tpu_custom_call.1} parent=1 // pred_fallthru
      _
    // Predicated region
    $region46: #{tpu_custom_call.1} parent=1 // pred_check
      _
    $region47: #{tpu_custom_call.1} parent=1 // pred_check_branch
      %1745 = sbr.rel (0) target = $region49
    $region48: #{tpu_custom_call.1} parent=1 // pred_region
      %1747 = dma.done [#allocation4], 8192
    $region49: #{tpu_custom_call.1} parent=1 // pred_fallthru
      _
    %1748 = vsyncpa [#allocation3], 1
    %1749 = vsyncpa [#allocation6], 1
    %1750 = vsyncpa [#allocation9], 1
    %1751 = vsyncpa [#allocation4], 1

</llo_original>
